<compile_context>
chip_gen: v5e
topology: v5e:2x2
jax: 0.10.0
libtpu: 0.0.40
codegen_flags: <defaults>
</compile_context>

<pallas_src>
import functools
import math

import jax
import jax.numpy as jnp
from jax import lax
from jax.experimental import pallas as pl
from jax.experimental.pallas import tpu as pltpu

# ---------------- small synthetic config (BaseModelArgs) ----------------
VOCAB = 256
DIM = 128
N_HEAD = 2
N_LOCAL_HEADS = 2
HEAD_DIM = 64           # dim // n_head
INTERMEDIATE = 256
N_LAYER = 2
CODEBOOK_SIZE = 32
NUM_CODEBOOKS = 2
MAX_SEQ_LEN = 32
NORM_EPS = 1e-5
ROPE_BASE = 10000.0
INITIALIZER_RANGE = 0.02
SEMANTIC_TOKEN_ID = 5
TIE_WORD_EMBEDDINGS = False
DROPOUT = 0.0           # inference: dropout is identity

Q_WIDTH = N_HEAD * HEAD_DIM
KV_WIDTH = N_LOCAL_HEADS * HEAD_DIM
QKV_OUT = (N_HEAD + 2 * N_LOCAL_HEADS) * HEAD_DIM


# ---------------- fused transformer-block kernel ----------------

def _block_kernel(x_ref, cos_ref, sin_ref, rot_ref,
                  attn_norm_ref, wqkv_ref, wo_ref,
                  ffn_norm_ref, w13_ref, w2_ref,
                  o_ref, *, n_head, n_local_heads, head_dim, eps, scale):
    x = x_ref[0]                                   # (S, D) f32
    S = x.shape[0]
    qw = n_head * head_dim
    kvw = n_local_heads * head_dim

    # --- RMSNorm (attention) ---
    var = jnp.mean(x * x, axis=-1, keepdims=True)
    xn = x * lax.rsqrt(var + eps) * attn_norm_ref[...]

    # --- QKV projection (bf16 MXU, f32 accumulate) ---
    qkv = jnp.dot(xn.astype(jnp.bfloat16), wqkv_ref[...],
                  preferred_element_type=jnp.float32)      # (S, QKV_OUT)
    q = qkv[:, :qw]
    k = qkv[:, qw:qw + kvw]
    v = qkv[:, qw + kvw:]

    # --- RoPE: interleaved-pair rotation via block-diag pair-swap matmul ---
    cos = cos_ref[...]                              # (S, qw) f32
    sin = sin_ref[...]
    rot = rot_ref[...]                              # (qw, qw) bf16
    q_sw = jnp.dot(q.astype(jnp.bfloat16), rot,
                   preferred_element_type=jnp.float32)
    q = q * cos + q_sw * sin
    k_sw = jnp.dot(k.astype(jnp.bfloat16), rot[:kvw, :kvw],
                   preferred_element_type=jnp.float32)
    k = k * cos[:, :kvw] + k_sw * sin[:, :kvw]

    # --- causal attention, all heads in this grid step ---
    q_b = q.astype(jnp.bfloat16)
    k_b = k.astype(jnp.bfloat16)
    v_b = v.astype(jnp.bfloat16)
    row = lax.broadcasted_iota(jnp.int32, (S, S), 0)
    col = lax.broadcasted_iota(jnp.int32, (S, S), 1)
    causal = col <= row
    rep = n_head // n_local_heads
    heads = []
    for h in range(n_head):                         # static, tiny head count
        kvh = h // rep
        qh = q_b[:, h * head_dim:(h + 1) * head_dim]
        kh = k_b[:, kvh * head_dim:(kvh + 1) * head_dim]
        vh = v_b[:, kvh * head_dim:(kvh + 1) * head_dim]
        s = lax.dot_general(qh, kh, (((1,), (1,)), ((), ())),
                            preferred_element_type=jnp.float32) * scale
        s = jnp.where(causal, s, -1e30)             # fp32 scores, is_causal=True
        m = jnp.max(s, axis=-1, keepdims=True)
        p = jnp.exp(s - m)
        p = p * pl.reciprocal(jnp.sum(p, axis=-1, keepdims=True), approx=True)
        heads.append(jnp.dot(p.astype(jnp.bfloat16), vh,
                             preferred_element_type=jnp.float32))
    o = jnp.concatenate(heads, axis=-1)             # (S, qw) f32

    # --- output projection + residual ---
    attn_out = jnp.dot(o.astype(jnp.bfloat16), wo_ref[...],
                       preferred_element_type=jnp.float32)
    h1 = x + attn_out

    # --- RMSNorm (ffn) ---
    var2 = jnp.mean(h1 * h1, axis=-1, keepdims=True)
    hn = h1 * lax.rsqrt(var2 + eps) * ffn_norm_ref[...]

    # --- SwiGLU FFN with fused (w1 | w3) up-projection ---
    h13 = jnp.dot(hn.astype(jnp.bfloat16), w13_ref[...],
                  preferred_element_type=jnp.float32)       # (S, 2*I)
    inter = h13.shape[-1] // 2
    g = h13[:, :inter]
    u = h13[:, inter:]
    act = (g * lax.logistic(g)) * u                 # SiLU(w1 x) * (w3 x)
    ff = jnp.dot(act.astype(jnp.bfloat16), w2_ref[...],
                 preferred_element_type=jnp.float32)
    o_ref[0] = h1 + ff


def transformer_block(lp, x, rope_cos, rope_sin, rot):
    B, S, D = x.shape
    kernel = functools.partial(
        _block_kernel, n_head=N_HEAD, n_local_heads=N_LOCAL_HEADS,
        head_dim=HEAD_DIM, eps=NORM_EPS, scale=1.0 / math.sqrt(HEAD_DIM))
    return pl.pallas_call(
        kernel,
        grid=(B,),
        out_shape=jax.ShapeDtypeStruct((B, S, D), jnp.float32),
        in_specs=[
            pl.BlockSpec((1, S, D), lambda b: (b, 0, 0)),          # x
            pl.BlockSpec((S, Q_WIDTH), lambda b: (0, 0)),          # rope cos
            pl.BlockSpec((S, Q_WIDTH), lambda b: (0, 0)),          # rope sin
            pl.BlockSpec((Q_WIDTH, Q_WIDTH), lambda b: (0, 0)),    # pair-swap mat
            pl.BlockSpec((1, D), lambda b: (0, 0)),                # attn norm
            pl.BlockSpec((D, QKV_OUT), lambda b: (0, 0)),          # wqkv
            pl.BlockSpec((Q_WIDTH, D), lambda b: (0, 0)),          # wo
            pl.BlockSpec((1, D), lambda b: (0, 0)),                # ffn norm
            pl.BlockSpec((D, 2 * INTERMEDIATE), lambda b: (0, 0)), # w1|w3
            pl.BlockSpec((INTERMEDIATE, D), lambda b: (0, 0)),     # w2
        ],
        out_specs=pl.BlockSpec((1, S, D), lambda b: (b, 0, 0)),
        compiler_params=pltpu.CompilerParams(
            dimension_semantics=("parallel",)),                    # v7x: 2 TCs
    )(x, rope_cos, rope_sin, rot, lp["attention_norm"], lp["wqkv"], lp["wo"],
      lp["ffn_norm"], lp["w13"], lp["w2"])


# ---------------- fused final norm + output projection ----------------

def _head_kernel(x_ref, norm_w_ref, w_out_ref, o_ref, *, eps):
    x = x_ref[...]                                  # (B*S, D) f32
    var = jnp.mean(x * x, axis=-1, keepdims=True)
    xn = (x * lax.rsqrt(var + eps) * norm_w_ref[...]).astype(jnp.bfloat16)
    o_ref[...] = jnp.dot(xn, w_out_ref[...], preferred_element_type=jnp.float32)


def norm_and_project(x2d, norm_w, w_out):
    M, D = x2d.shape
    V = w_out.shape[1]
    return pl.pallas_call(
        functools.partial(_head_kernel, eps=NORM_EPS),
        grid=(1,),
        out_shape=jax.ShapeDtypeStruct((M, V), jnp.float32),
        in_specs=[pl.BlockSpec((M, D), lambda i: (0, 0)),
                  pl.BlockSpec((1, D), lambda i: (0, 0)),
                  pl.BlockSpec((D, V), lambda i: (0, 0))],
        out_specs=pl.BlockSpec((M, V), lambda i: (0, 0)),
    )(x2d, norm_w, w_out)


# ---------------- plain-JAX glue (embedding gathers, RoPE tables) ----------------

def precompute_rope_tables(max_seq_len, head_dim, n_head, base):
    half = head_dim // 2
    freqs = 1.0 / (base ** (jnp.arange(0, head_dim, 2)[:half].astype(jnp.float32)
                            / head_dim))
    t = jnp.arange(max_seq_len, dtype=jnp.float32)
    ang = jnp.outer(t, freqs)                              # (S, half)
    cos = jnp.repeat(jnp.cos(ang), 2, axis=-1)             # interleave-expanded
    sin = jnp.repeat(jnp.sin(ang), 2, axis=-1)             # (S, head_dim)
    cos = jnp.tile(cos, (1, n_head))                       # (S, n_head*head_dim)
    sin = jnp.tile(sin, (1, n_head))
    return cos, sin


def make_pair_swap_matrix(n_head, head_dim):
    # per-head block R: (x @ R)[2i] = -x[2i+1], (x @ R)[2i+1] = x[2i]
    blk = jnp.zeros((head_dim, head_dim), jnp.float32)
    idx = jnp.arange(head_dim // 2)
    blk = blk.at[2 * idx + 1, 2 * idx].set(-1.0)
    blk = blk.at[2 * idx, 2 * idx + 1].set(1.0)
    full = jnp.kron(jnp.eye(n_head, dtype=jnp.float32), blk)
    return full.astype(jnp.bfloat16)


def embed(params, inp):
    # inp: (B, 1+NUM_CODEBOOKS, S) int32
    main = inp[:, 0]                                   # (B, S)
    x = params["embeddings"][main]                     # (B, S, D)
    sem_mask = (main == SEMANTIC_TOKEN_ID)[..., None]  # (B, S, 1)
    for i in range(NUM_CODEBOOKS):
        idx = inp[:, i + 1] + i * CODEBOOK_SIZE
        emb = params["codebook_embeddings"][idx]       # (B, S, D)
        emb = jnp.where(sem_mask, emb, 0.0)            # emb[x[:,0]!=sem] = 0
        x = x + emb
    return x


def base_transformer_forward(params, inp, key_padding_mask=None):
    # key_padding_mask=None path: SDPA with is_causal=True
    # TODO(synk): key_padding_mask branch (causal & ~pad) not implemented.
    B, _, S = inp.shape
    x = embed(params, inp)
    rope_cos = params["rope_cos"][:S]
    rope_sin = params["rope_sin"][:S]
    rot = params["rope_rot"]
    for lp in params["layers"]:
        x = transformer_block(lp, x, rope_cos, rope_sin, rot)
    logits = norm_and_project(x.reshape(B * S, DIM),
                              params["norm_weight"], params["output"])
    return logits.reshape(B, S, VOCAB), x  # (logits, hidden_states)


# ---------------- deterministic parameter init ----------------

def init_params(key):
    std = INITIALIZER_RANGE
    ks = jax.random.split(key, 3 + N_LAYER)
    emb = std * jax.random.normal(ks[0], (VOCAB, DIM), jnp.float32)
    rope_cos, rope_sin = precompute_rope_tables(MAX_SEQ_LEN, HEAD_DIM, N_HEAD,
                                                ROPE_BASE)
    params = {
        "embeddings": emb,
        "codebook_embeddings": std * jax.random.normal(
            ks[1], (CODEBOOK_SIZE * NUM_CODEBOOKS, DIM), jnp.float32),
        "norm_weight": jnp.ones((1, DIM), jnp.float32),
        "rope_cos": rope_cos,
        "rope_sin": rope_sin,
        "rope_rot": make_pair_swap_matrix(N_HEAD, HEAD_DIM),
        "layers": [],
    }
    if TIE_WORD_EMBEDDINGS:
        # pre-transpose once at init instead of per-forward
        params["output"] = emb.T.astype(jnp.bfloat16)
    else:
        params["output"] = (std * jax.random.normal(
            ks[2], (DIM, VOCAB), jnp.float32)).astype(jnp.bfloat16)
    for l in range(N_LAYER):
        lks = jax.random.split(ks[3 + l], 5)
        w1 = std * jax.random.normal(lks[2], (DIM, INTERMEDIATE), jnp.float32)
        w3 = std * jax.random.normal(lks[3], (DIM, INTERMEDIATE), jnp.float32)
        params["layers"].append({
            "wqkv": (std * jax.random.normal(
                lks[0], (DIM, QKV_OUT), jnp.float32)).astype(jnp.bfloat16),
            "wo": (std * jax.random.normal(
                lks[1], (Q_WIDTH, DIM), jnp.float32)).astype(jnp.bfloat16),
            "w13": jnp.concatenate([w1, w3], axis=1).astype(jnp.bfloat16),
            "w2": (std * jax.random.normal(
                lks[4], (INTERMEDIATE, DIM), jnp.float32)).astype(jnp.bfloat16),
            "attention_norm": jnp.ones((1, DIM), jnp.float32),
            "ffn_norm": jnp.ones((1, DIM), jnp.float32),
        })
    return params


if __name__ == "__main__":
    key = jax.random.PRNGKey(0)
    pkey, mkey, ckey, skey = jax.random.split(key, 4)

    params = init_params(pkey)

    B, S = 2, 16
    main_tokens = jax.random.randint(mkey, (B, S), 0, VOCAB, dtype=jnp.int32)
    # Roughly half the positions are semantic tokens so codebook embeddings fire.
    sem_sel = jax.random.bernoulli(skey, 0.5, (B, S))
    main_tokens = jnp.where(sem_sel, SEMANTIC_TOKEN_ID, main_tokens)
    codebook_tokens = jax.random.randint(ckey, (B, NUM_CODEBOOKS, S), 0,
                                         CODEBOOK_SIZE, dtype=jnp.int32)
    inp = jnp.concatenate([main_tokens[:, None, :], codebook_tokens], axis=1)

    fwd = jax.jit(base_transformer_forward)
    logits, hidden = fwd(params, inp)
    jax.block_until_ready((logits, hidden))
    assert logits.shape == (B, S, VOCAB)
    assert hidden.shape == (B, S, DIM)
    assert bool(jnp.all(jnp.isfinite(logits)))
    assert bool(jnp.all(jnp.isfinite(hidden)))
    print("KERNEL_OK")
</pallas_src>

<mosaic_0001>
module attributes {stable_mosaic.version = 11 : i64} {
  func.func @_head_kernel(%arg0: i32, %arg1: memref<32x128xf32, #tpu.memory_space<vmem>>, %arg2: memref<1x128xf32, #tpu.memory_space<vmem>>, %arg3: memref<128x256xbf16, #tpu.memory_space<vmem>>, %arg4: memref<32x256xf32, #tpu.memory_space<vmem>>) attributes {dimension_semantics = [#tpu.dimension_semantics<arbitrary>], iteration_bounds = array<i64: 1>, scalar_prefetch = 0 : i64, scratch_operands = 0 : i64, tpu.core_type = #tpu.core_type<tc>, window_params = [{pipeline_mode = #tpu.pipeline_mode<synchronous>, transform_indices = @transform_0, window_bounds = array<i64: 32, 128>}, {pipeline_mode = #tpu.pipeline_mode<synchronous>, transform_indices = @transform_1, window_bounds = array<i64: 1, 128>}, {pipeline_mode = #tpu.pipeline_mode<synchronous>, transform_indices = @transform_2, window_bounds = array<i64: 128, 256>}, {pipeline_mode = #tpu.pipeline_mode<synchronous>, transform_indices = @transform_3, window_bounds = array<i64: 32, 256>}]} {
    %c0 = arith.constant 0 : index
    %c0_0 = arith.constant 0 : index
    %0 = vector.load %arg1[%c0, %c0_0] : memref<32x128xf32, #tpu.memory_space<vmem>>, vector<32x128xf32>
    %1 = arith.mulf %0, %0 : vector<32x128xf32>
    %cst = arith.constant dense<0.000000e+00> : vector<32xf32>
    %2 = vector.multi_reduction <add>, %1, %cst [1] : vector<32x128xf32> to vector<32xf32>
    %3 = vector.shape_cast %2 : vector<32xf32> to vector<32x1xf32>
    %cst_1 = arith.constant 1.280000e+02 : f32
    %4 = vector.broadcast %cst_1 : f32 to vector<32x1xf32>
    %5 = arith.divf %3, %4 : vector<32x1xf32>
    %cst_2 = arith.constant 9.99999974E-6 : f32
    %6 = vector.broadcast %cst_2 : f32 to vector<32x1xf32>
    %7 = arith.addf %5, %6 : vector<32x1xf32>
    %8 = math.rsqrt %7 : vector<32x1xf32>
    %9 = vector.broadcast %8 : vector<32x1xf32> to vector<32x128xf32>
    %10 = arith.mulf %0, %9 : vector<32x128xf32>
    %c0_3 = arith.constant 0 : index
    %c0_4 = arith.constant 0 : index
    %11 = vector.load %arg2[%c0_3, %c0_4] : memref<1x128xf32, #tpu.memory_space<vmem>>, vector<1x128xf32>
    %12 = vector.broadcast %11 : vector<1x128xf32> to vector<32x128xf32>
    %13 = arith.mulf %10, %12 : vector<32x128xf32>
    %14 = arith.truncf %13 : vector<32x128xf32> to vector<32x128xbf16>
    %c0_5 = arith.constant 0 : index
    %c0_6 = arith.constant 0 : index
    %15 = vector.load %arg3[%c0_5, %c0_6] : memref<128x256xbf16, #tpu.memory_space<vmem>>, vector<128x256xbf16>
    %cst_7 = arith.constant dense<0.000000e+00> : vector<32x256xf32>
    %16 = tpu.matmul %14, %15, %cst_7 {dimension_numbers = #tpu.dot_dimension_numbers<[1], [0], [0], [1], [0, 0, 1, 1], [], []>} : vector<32x128xbf16>, vector<128x256xbf16>, vector<32x256xf32> -> vector<32x256xf32>
    %c0_8 = arith.constant 0 : index
    %c0_9 = arith.constant 0 : index
    %17 = vector.load %arg4[%c0_8, %c0_9] : memref<32x256xf32, #tpu.memory_space<vmem>>, vector<32x256xf32>
    tpu.vector_store %arg4[%c0_8, %c0_9], %16 {strides = array<i32>} : memref<32x256xf32, #tpu.memory_space<vmem>>, vector<32x256xf32>,
    return
  }
  func.func @transform_0(%arg0: i32) -> (i32, i32) {
    %c0_i32 = arith.constant 0 : i32
    %c0_i32_0 = arith.constant 0 : i32
    %c0_i32_1 = arith.constant 0 : i32
    return %c0_i32, %c0_i32_0 : i32, i32
  }
  func.func @transform_1(%arg0: i32) -> (i32, i32) {
    %c0_i32 = arith.constant 0 : i32
    %c0_i32_0 = arith.constant 0 : i32
    %c0_i32_1 = arith.constant 0 : i32
    return %c0_i32, %c0_i32_0 : i32, i32
  }
  func.func @transform_2(%arg0: i32) -> (i32, i32) {
    %c0_i32 = arith.constant 0 : i32
    %c0_i32_0 = arith.constant 0 : i32
    %c0_i32_1 = arith.constant 0 : i32
    return %c0_i32, %c0_i32_0 : i32, i32
  }
  func.func @transform_3(%arg0: i32) -> (i32, i32) {
    %c0_i32 = arith.constant 0 : i32
    %c0_i32_0 = arith.constant 0 : i32
    %c0_i32_1 = arith.constant 0 : i32
    return %c0_i32, %c0_i32_0 : i32, i32
  }
}

module attributes {stable_mosaic.version = 11 : i64} {
  func.func @_block_kernel(%arg0: i32, %arg1: memref<1x16x128xf32, #tpu.memory_space<vmem>>, %arg2: memref<16x128xf32, #tpu.memory_space<vmem>>, %arg3: memref<16x128xf32, #tpu.memory_space<vmem>>, %arg4: memref<128x128xbf16, #tpu.memory_space<vmem>>, %arg5: memref<1x128xf32, #tpu.memory_space<vmem>>, %arg6: memref<128x384xbf16, #tpu.memory_space<vmem>>, %arg7: memref<128x128xbf16, #tpu.memory_space<vmem>>, %arg8: memref<1x128xf32, #tpu.memory_space<vmem>>, %arg9: memref<128x512xbf16, #tpu.memory_space<vmem>>, %arg10: memref<256x128xbf16, #tpu.memory_space<vmem>>, %arg11: memref<1x16x128xf32, #tpu.memory_space<vmem>>) attributes {dimension_semantics = [#tpu.dimension_semantics<parallel>], iteration_bounds = array<i64: 2>, scalar_prefetch = 0 : i64, scratch_operands = 0 : i64, tpu.core_type = #tpu.core_type<tc>, window_params = [{transform_indices = @transform_0, window_bounds = array<i64: 1, 16, 128>}, {pipeline_mode = #tpu.pipeline_mode<synchronous>, transform_indices = @transform_1, window_bounds = array<i64: 16, 128>}, {pipeline_mode = #tpu.pipeline_mode<synchronous>, transform_indices = @transform_2, window_bounds = array<i64: 16, 128>}, {pipeline_mode = #tpu.pipeline_mode<synchronous>, transform_indices = @transform_3, window_bounds = array<i64: 128, 128>}, {pipeline_mode = #tpu.pipeline_mode<synchronous>, transform_indices = @transform_4, window_bounds = array<i64: 1, 128>}, {pipeline_mode = #tpu.pipeline_mode<synchronous>, transform_indices = @transform_5, window_bounds = array<i64: 128, 384>}, {pipeline_mode = #tpu.pipeline_mode<synchronous>, transform_indices = @transform_6, window_bounds = array<i64: 128, 128>}, {pipeline_mode = #tpu.pipeline_mode<synchronous>, transform_indices = @transform_7, window_bounds = array<i64: 1, 128>}, {pipeline_mode = #tpu.pipeline_mode<synchronous>, transform_indices = @transform_8, window_bounds = array<i64: 128, 512>}, {pipeline_mode = #tpu.pipeline_mode<synchronous>, transform_indices = @transform_9, window_bounds = array<i64: 256, 128>}, {transform_indices = @transform_10, window_bounds = array<i64: 1, 16, 128>}]} {
    %c0 = arith.constant 0 : index
    %c0_0 = arith.constant 0 : index
    %c0_1 = arith.constant 0 : index
    %0 = vector.load %arg1[%c0, %c0_0, %c0_1] : memref<1x16x128xf32, #tpu.memory_space<vmem>>, vector<1x16x128xf32>
    %1 = vector.shape_cast %0 : vector<1x16x128xf32> to vector<16x128xf32>
    %2 = arith.mulf %1, %1 : vector<16x128xf32>
    %cst = arith.constant dense<0.000000e+00> : vector<16xf32>
    %3 = vector.multi_reduction <add>, %2, %cst [1] : vector<16x128xf32> to vector<16xf32>
    %4 = vector.shape_cast %3 : vector<16xf32> to vector<16x1xf32>
    %cst_2 = arith.constant 1.280000e+02 : f32
    %5 = vector.broadcast %cst_2 : f32 to vector<16x1xf32>
    %6 = arith.divf %4, %5 : vector<16x1xf32>
    %cst_3 = arith.constant 9.99999974E-6 : f32
    %7 = vector.broadcast %cst_3 : f32 to vector<16x1xf32>
    %8 = arith.addf %6, %7 : vector<16x1xf32>
    %9 = math.rsqrt %8 : vector<16x1xf32>
    %10 = vector.broadcast %9 : vector<16x1xf32> to vector<16x128xf32>
    %11 = arith.mulf %1, %10 : vector<16x128xf32>
    %c0_4 = arith.constant 0 : index
    %c0_5 = arith.constant 0 : index
    %12 = vector.load %arg5[%c0_4, %c0_5] : memref<1x128xf32, #tpu.memory_space<vmem>>, vector<1x128xf32>
    %13 = vector.broadcast %12 : vector<1x128xf32> to vector<16x128xf32>
    %14 = arith.mulf %11, %13 : vector<16x128xf32>
    %15 = arith.truncf %14 : vector<16x128xf32> to vector<16x128xbf16>
    %c0_6 = arith.constant 0 : index
    %c0_7 = arith.constant 0 : index
    %16 = vector.load %arg6[%c0_6, %c0_7] : memref<128x384xbf16, #tpu.memory_space<vmem>>, vector<128x384xbf16>
    %cst_8 = arith.constant dense<0.000000e+00> : vector<16x384xf32>
    %17 = tpu.matmul %15, %16, %cst_8 {dimension_numbers = #tpu.dot_dimension_numbers<[1], [0], [0], [1], [0, 0, 1, 1], [], []>} : vector<16x128xbf16>, vector<128x384xbf16>, vector<16x384xf32> -> vector<16x384xf32>
    %18 = vector.extract_strided_slice %17 {offsets = [0, 0], sizes = [16, 128], strides = [1, 1]} : vector<16x384xf32> to vector<16x128xf32>
    %19 = vector.extract_strided_slice %17 {offsets = [0, 128], sizes = [16, 128], strides = [1, 1]} : vector<16x384xf32> to vector<16x128xf32>
    %20 = vector.extract_strided_slice %17 {offsets = [0, 256], sizes = [16, 128], strides = [1, 1]} : vector<16x384xf32> to vector<16x128xf32>
    %c0_9 = arith.constant 0 : index
    %c0_10 = arith.constant 0 : index
    %21 = vector.load %arg2[%c0_9, %c0_10] : memref<16x128xf32, #tpu.memory_space<vmem>>, vector<16x128xf32>
    %c0_11 = arith.constant 0 : index
    %c0_12 = arith.constant 0 : index
    %22 = vector.load %arg3[%c0_11, %c0_12] : memref<16x128xf32, #tpu.memory_space<vmem>>, vector<16x128xf32>
    %c0_13 = arith.constant 0 : index
    %c0_14 = arith.constant 0 : index
    %23 = vector.load %arg4[%c0_13, %c0_14] : memref<128x128xbf16, #tpu.memory_space<vmem>>, vector<128x128xbf16>
    %24 = arith.truncf %18 : vector<16x128xf32> to vector<16x128xbf16>
    %cst_15 = arith.constant dense<0.000000e+00> : vector<16x128xf32>
    %25 = tpu.matmul %24, %23, %cst_15 {dimension_numbers = #tpu.dot_dimension_numbers<[1], [0], [0], [1], [0, 0, 1, 1], [], []>} : vector<16x128xbf16>, vector<128x128xbf16>, vector<16x128xf32> -> vector<16x128xf32>
    %26 = arith.mulf %18, %21 : vector<16x128xf32>
    %27 = arith.mulf %25, %22 : vector<16x128xf32>
    %28 = arith.addf %26, %27 : vector<16x128xf32>
    %29 = arith.truncf %19 : vector<16x128xf32> to vector<16x128xbf16>
    %cst_16 = arith.constant dense<0.000000e+00> : vector<16x128xf32>
    %30 = tpu.matmul %29, %23, %cst_16 {dimension_numbers = #tpu.dot_dimension_numbers<[1], [0], [0], [1], [0, 0, 1, 1], [], []>} : vector<16x128xbf16>, vector<128x128xbf16>, vector<16x128xf32> -> vector<16x128xf32>
    %31 = arith.mulf %19, %21 : vector<16x128xf32>
    %32 = arith.mulf %30, %22 : vector<16x128xf32>
    %33 = arith.addf %31, %32 : vector<16x128xf32>
    %34 = arith.truncf %28 : vector<16x128xf32> to vector<16x128xbf16>
    %35 = arith.truncf %33 : vector<16x128xf32> to vector<16x128xbf16>
    %36 = arith.truncf %20 : vector<16x128xf32> to vector<16x128xbf16>
    %37 = tpu.iota {dimensions = array<i32: 0>} : vector<16x16xi32>
    %38 = tpu.iota {dimensions = array<i32: 1>} : vector<16x16xi32>
    %39 = arith.cmpi sle, %38, %37 : vector<16x16xi32>
    %40 = vector.extract_strided_slice %34 {offsets = [0, 0], sizes = [16, 64], strides = [1, 1]} : vector<16x128xbf16> to vector<16x64xbf16>
    %41 = vector.extract_strided_slice %35 {offsets = [0, 0], sizes = [16, 64], strides = [1, 1]} : vector<16x128xbf16> to vector<16x64xbf16>
    %42 = vector.extract_strided_slice %36 {offsets = [0, 0], sizes = [16, 64], strides = [1, 1]} : vector<16x128xbf16> to vector<16x64xbf16>
    %cst_17 = arith.constant dense<0.000000e+00> : vector<16x16xf32>
    %43 = tpu.matmul %40, %41, %cst_17 {dimension_numbers = #tpu.dot_dimension_numbers<[1], [1], [0], [0], [0, 0, 1, 0], [], []>} : vector<16x64xbf16>, vector<16x64xbf16>, vector<16x16xf32> -> vector<16x16xf32>
    %cst_18 = arith.constant 1.250000e-01 : f32
    %44 = vector.broadcast %cst_18 : f32 to vector<16x16xf32>
    %45 = arith.mulf %43, %44 : vector<16x16xf32>
    %cst_19 = arith.constant -1.000000e+30 : f32
    %46 = vector.broadcast %cst_19 : f32 to vector<16x16xf32>
    %47 = arith.select %39, %45, %46 : vector<16x16xi1>, vector<16x16xf32>
    %cst_20 = arith.constant dense<0xFF800000> : vector<16xf32>
    %48 = vector.multi_reduction <maximumf>, %47, %cst_20 [1] : vector<16x16xf32> to vector<16xf32>
    %49 = vector.shape_cast %48 : vector<16xf32> to vector<16x1xf32>
    %50 = vector.broadcast %49 : vector<16x1xf32> to vector<16x16xf32>
    %51 = arith.subf %47, %50 : vector<16x16xf32>
    %52 = math.exp %51 : vector<16x16xf32>
    %cst_21 = arith.constant dense<0.000000e+00> : vector<16xf32>
    %53 = vector.multi_reduction <add>, %52, %cst_21 [1] : vector<16x16xf32> to vector<16xf32>
    %54 = vector.shape_cast %53 : vector<16xf32> to vector<16x1xf32>
    %55 = tpu.reciprocal %54 {approx = true} : vector<16x1xf32> -> vector<16x1xf32>
    %56 = vector.broadcast %55 : vector<16x1xf32> to vector<16x16xf32>
    %57 = arith.mulf %52, %56 : vector<16x16xf32>
    %58 = arith.truncf %57 : vector<16x16xf32> to vector<16x16xbf16>
    %cst_22 = arith.constant dense<0.000000e+00> : vector<16x64xf32>
    %59 = tpu.matmul %58, %42, %cst_22 {dimension_numbers = #tpu.dot_dimension_numbers<[1], [0], [0], [1], [0, 0, 1, 1], [], []>} : vector<16x16xbf16>, vector<16x64xbf16>, vector<16x64xf32> -> vector<16x64xf32>
    %60 = vector.extract_strided_slice %34 {offsets = [0, 64], sizes = [16, 64], strides = [1, 1]} : vector<16x128xbf16> to vector<16x64xbf16>
    %61 = vector.extract_strided_slice %35 {offsets = [0, 64], sizes = [16, 64], strides = [1, 1]} : vector<16x128xbf16> to vector<16x64xbf16>
    %62 = vector.extract_strided_slice %36 {offsets = [0, 64], sizes = [16, 64], strides = [1, 1]} : vector<16x128xbf16> to vector<16x64xbf16>
    %cst_23 = arith.constant dense<0.000000e+00> : vector<16x16xf32>
    %63 = tpu.matmul %60, %61, %cst_23 {dimension_numbers = #tpu.dot_dimension_numbers<[1], [1], [0], [0], [0, 0, 1, 0], [], []>} : vector<16x64xbf16>, vector<16x64xbf16>, vector<16x16xf32> -> vector<16x16xf32>
    %cst_24 = arith.constant 1.250000e-01 : f32
    %64 = vector.broadcast %cst_24 : f32 to vector<16x16xf32>
    %65 = arith.mulf %63, %64 : vector<16x16xf32>
    %cst_25 = arith.constant -1.000000e+30 : f32
    %66 = vector.broadcast %cst_25 : f32 to vector<16x16xf32>
    %67 = arith.select %39, %65, %66 : vector<16x16xi1>, vector<16x16xf32>
    %cst_26 = arith.constant dense<0xFF800000> : vector<16xf32>
    %68 = vector.multi_reduction <maximumf>, %67, %cst_26 [1] : vector<16x16xf32> to vector<16xf32>
    %69 = vector.shape_cast %68 : vector<16xf32> to vector<16x1xf32>
    %70 = vector.broadcast %69 : vector<16x1xf32> to vector<16x16xf32>
    %71 = arith.subf %67, %70 : vector<16x16xf32>
    %72 = math.exp %71 : vector<16x16xf32>
    %cst_27 = arith.constant dense<0.000000e+00> : vector<16xf32>
    %73 = vector.multi_reduction <add>, %72, %cst_27 [1] : vector<16x16xf32> to vector<16xf32>
    %74 = vector.shape_cast %73 : vector<16xf32> to vector<16x1xf32>
    %75 = tpu.reciprocal %74 {approx = true} : vector<16x1xf32> -> vector<16x1xf32>
    %76 = vector.broadcast %75 : vector<16x1xf32> to vector<16x16xf32>
    %77 = arith.mulf %72, %76 : vector<16x16xf32>
    %78 = arith.truncf %77 : vector<16x16xf32> to vector<16x16xbf16>
    %cst_28 = arith.constant dense<0.000000e+00> : vector<16x64xf32>
    %79 = tpu.matmul %78, %62, %cst_28 {dimension_numbers = #tpu.dot_dimension_numbers<[1], [0], [0], [1], [0, 0, 1, 1], [], []>} : vector<16x16xbf16>, vector<16x64xbf16>, vector<16x64xf32> -> vector<16x64xf32>
    %80 = tpu.concatenate %59, %79 in 1 : vector<16x64xf32>, vector<16x64xf32> -> vector<16x128xf32>
    %81 = arith.truncf %80 : vector<16x128xf32> to vector<16x128xbf16>
    %c0_29 = arith.constant 0 : index
    %c0_30 = arith.constant 0 : index
    %82 = vector.load %arg7[%c0_29, %c0_30] : memref<128x128xbf16, #tpu.memory_space<vmem>>, vector<128x128xbf16>
    %cst_31 = arith.constant dense<0.000000e+00> : vector<16x128xf32>
    %83 = tpu.matmul %81, %82, %cst_31 {dimension_numbers = #tpu.dot_dimension_numbers<[1], [0], [0], [1], [0, 0, 1, 1], [], []>} : vector<16x128xbf16>, vector<128x128xbf16>, vector<16x128xf32> -> vector<16x128xf32>
    %84 = arith.addf %1, %83 : vector<16x128xf32>
    %85 = arith.mulf %84, %84 : vector<16x128xf32>
    %cst_32 = arith.constant dense<0.000000e+00> : vector<16xf32>
    %86 = vector.multi_reduction <add>, %85, %cst_32 [1] : vector<16x128xf32> to vector<16xf32>
    %87 = vector.shape_cast %86 : vector<16xf32> to vector<16x1xf32>
    %cst_33 = arith.constant 1.280000e+02 : f32
    %88 = vector.broadcast %cst_33 : f32 to vector<16x1xf32>
    %89 = arith.divf %87, %88 : vector<16x1xf32>
    %cst_34 = arith.constant 9.99999974E-6 : f32
    %90 = vector.broadcast %cst_34 : f32 to vector<16x1xf32>
    %91 = arith.addf %89, %90 : vector<16x1xf32>
    %92 = math.rsqrt %91 : vector<16x1xf32>
    %93 = vector.broadcast %92 : vector<16x1xf32> to vector<16x128xf32>
    %94 = arith.mulf %84, %93 : vector<16x128xf32>
    %c0_35 = arith.constant 0 : index
    %c0_36 = arith.constant 0 : index
    %95 = vector.load %arg8[%c0_35, %c0_36] : memref<1x128xf32, #tpu.memory_space<vmem>>, vector<1x128xf32>
    %96 = vector.broadcast %95 : vector<1x128xf32> to vector<16x128xf32>
    %97 = arith.mulf %94, %96 : vector<16x128xf32>
    %98 = arith.truncf %97 : vector<16x128xf32> to vector<16x128xbf16>
    %c0_37 = arith.constant 0 : index
    %c0_38 = arith.constant 0 : index
    %99 = vector.load %arg9[%c0_37, %c0_38] : memref<128x512xbf16, #tpu.memory_space<vmem>>, vector<128x512xbf16>
    %cst_39 = arith.constant dense<0.000000e+00> : vector<16x512xf32>
    %100 = tpu.matmul %98, %99, %cst_39 {dimension_numbers = #tpu.dot_dimension_numbers<[1], [0], [0], [1], [0, 0, 1, 1], [], []>} : vector<16x128xbf16>, vector<128x512xbf16>, vector<16x512xf32> -> vector<16x512xf32>
    %101 = vector.extract_strided_slice %100 {offsets = [0, 0], sizes = [16, 256], strides = [1, 1]} : vector<16x512xf32> to vector<16x256xf32>
    %102 = vector.extract_strided_slice %100 {offsets = [0, 256], sizes = [16, 256], strides = [1, 1]} : vector<16x512xf32> to vector<16x256xf32>
    %103 = arith.negf %101 : vector<16x256xf32>
    %104 = math.exp %103 : vector<16x256xf32>
    %cst_40 = arith.constant 1.000000e+00 : f32
    %105 = vector.broadcast %cst_40 : f32 to vector<16x256xf32>
    %106 = arith.addf %105, %104 : vector<16x256xf32>
    %107 = arith.divf %105, %106 : vector<16x256xf32>
    %108 = arith.mulf %101, %107 : vector<16x256xf32>
    %109 = arith.mulf %108, %102 : vector<16x256xf32>
    %110 = arith.truncf %109 : vector<16x256xf32> to vector<16x256xbf16>
    %c0_41 = arith.constant 0 : index
    %c0_42 = arith.constant 0 : index
    %111 = vector.load %arg10[%c0_41, %c0_42] : memref<256x128xbf16, #tpu.memory_space<vmem>>, vector<256x128xbf16>
    %cst_43 = arith.constant dense<0.000000e+00> : vector<16x128xf32>
    %112 = tpu.matmul %110, %111, %cst_43 {dimension_numbers = #tpu.dot_dimension_numbers<[1], [0], [0], [1], [0, 0, 1, 1], [], []>} : vector<16x256xbf16>, vector<256x128xbf16>, vector<16x128xf32> -> vector<16x128xf32>
    %113 = arith.addf %84, %112 : vector<16x128xf32>
    %c0_44 = arith.constant 0 : index
    %c0_45 = arith.constant 0 : index
    %c0_46 = arith.constant 0 : index
    %114 = vector.load %arg11[%c0_44, %c0_45, %c0_46] : memref<1x16x128xf32, #tpu.memory_space<vmem>>, vector<1x16x128xf32>
    %115 = vector.shape_cast %114 : vector<1x16x128xf32> to vector<16x128xf32>
    %116 = vector.shape_cast %113 : vector<16x128xf32> to vector<1x16x128xf32>
    tpu.vector_store %arg11[%c0_44, %c0_45, %c0_46], %116 {strides = array<i32>} : memref<1x16x128xf32, #tpu.memory_space<vmem>>, vector<1x16x128xf32>,
    return
  }
  func.func @transform_0(%arg0: i32) -> (i32, i32, i32) {
    %c0_i32 = arith.constant 0 : i32
    %c0_i32_0 = arith.constant 0 : i32
    %c0_i32_1 = arith.constant 0 : i32
    return %arg0, %c0_i32, %c0_i32_0 : i32, i32, i32
  }
  func.func @transform_1(%arg0: i32) -> (i32, i32) {
    %c0_i32 = arith.constant 0 : i32
    %c0_i32_0 = arith.constant 0 : i32
    %c0_i32_1 = arith.constant 0 : i32
    return %c0_i32, %c0_i32_0 : i32, i32
  }
  func.func @transform_2(%arg0: i32) -> (i32, i32) {
    %c0_i32 = arith.constant 0 : i32
    %c0_i32_0 = arith.constant 0 : i32
    %c0_i32_1 = arith.constant 0 : i32
    return %c0_i32, %c0_i32_0 : i32, i32
  }
  func.func @transform_3(%arg0: i32) -> (i32, i32) {
    %c0_i32 = arith.constant 0 : i32
    %c0_i32_0 = arith.constant 0 : i32
    %c0_i32_1 = arith.constant 0 : i32
    return %c0_i32, %c0_i32_0 : i32, i32
  }
  func.func @transform_4(%arg0: i32) -> (i32, i32) {
    %c0_i32 = arith.constant 0 : i32
    %c0_i32_0 = arith.constant 0 : i32
    %c0_i32_1 = arith.constant 0 : i32
    return %c0_i32, %c0_i32_0 : i32, i32
  }
  func.func @transform_5(%arg0: i32) -> (i32, i32) {
    %c0_i32 = arith.constant 0 : i32
    %c0_i32_0 = arith.constant 0 : i32
    %c0_i32_1 = arith.constant 0 : i32
    return %c0_i32, %c0_i32_0 : i32, i32
  }
  func.func @transform_6(%arg0: i32) -> (i32, i32) {
    %c0_i32 = arith.constant 0 : i32
    %c0_i32_0 = arith.constant 0 : i32
    %c0_i32_1 = arith.constant 0 : i32
    return %c0_i32, %c0_i32_0 : i32, i32
  }
  func.func @transform_7(%arg0: i32) -> (i32, i32) {
    %c0_i32 = arith.constant 0 : i32
    %c0_i32_0 = arith.constant 0 : i32
    %c0_i32_1 = arith.constant 0 : i32
    return %c0_i32, %c0_i32_0 : i32, i32
  }
  func.func @transform_8(%arg0: i32) -> (i32, i32) {
    %c0_i32 = arith.constant 0 : i32
    %c0_i32_0 = arith.constant 0 : i32
    %c0_i32_1 = arith.constant 0 : i32
    return %c0_i32, %c0_i32_0 : i32, i32
  }
  func.func @transform_9(%arg0: i32) -> (i32, i32) {
    %c0_i32 = arith.constant 0 : i32
    %c0_i32_0 = arith.constant 0 : i32
    %c0_i32_1 = arith.constant 0 : i32
    return %c0_i32, %c0_i32_0 : i32, i32
  }
  func.func @transform_10(%arg0: i32) -> (i32, i32, i32) {
    %c0_i32 = arith.constant 0 : i32
    %c0_i32_0 = arith.constant 0 : i32
    %c0_i32_1 = arith.constant 0 : i32
    return %arg0, %c0_i32, %c0_i32_0 : i32, i32, i32
  }
}

</mosaic_0001>

<llo_original>
// kernel: base_transformer_forward.5
$region0: #{base_transformer_forward.5}
  #allocation0 [shape = 'u32[]', space=smem, size = 0x4, offset = 0x4, fixed_abs, tag = 'smem constant byte address 0x4 - core index']
  #allocation1 [shape = 'u32[72,128]{1,0:T(1,128)}', space=vmem, size = 0x9000, scoped, tag = 'internal scratch']
  %s0 = inlined_call_operand.vmem [shape: f32[32,128], index: 0, kind: input, shape index: {}]
  %s1 = inlined_call_operand.vmem [shape: f32[1,128], index: 1, kind: input, shape index: {}]
  %s2 = inlined_call_operand.hbm [shape: bf16[128,256], index: 2, kind: input, shape index: {}]
  %s3 = inlined_call_operand.hbm [shape: f32[32,256], index: 3, kind: output, shape index: {}]
  %s4 = sld [smem:[#allocation0]]
  $region26: #{base_transformer_forward.5} parent=0
    _
  %s6 = ssub.s32 1, %s4
  %s7 = scalar_select 0, %s6, %s4
  $region1: #{base_transformer_forward.5} parent=0
    #allocation2 [shape = 'u8[65536]{0}', space=vmem, size = 0x10000, scoped, tag = 'input window, operand 2, single buffered']
    #allocation3 [shape = 's32[1]{0}', space=sflag, size = 0x4, scoped, tag = 'scoped memory for base_transformer_forward.5']
    #allocation4 [shape = 's32[1]{0}', space=sflag, size = 0x4, scoped, tag = 'scoped memory for base_transformer_forward.5']
    #allocation5 [shape = 'u8[32768]{0}', space=vmem, size = 0x8000, scoped, tag = 'output window, operand 0, single buffered']
    %8 = vsyncpa [#allocation3], 0
    %9 = vsyncpa [#allocation4], 0
    // Predicated region
    $region2: #{base_transformer_forward.5} parent=1 // pred_check
      _
    $region3: #{base_transformer_forward.5} parent=1 // pred_check_branch
      %11 = sbr.rel (0) target = $region5
    $region4: #{base_transformer_forward.5} parent=1 // pred_region
      _
    $region5: #{base_transformer_forward.5} parent=1 // pred_fallthru
      _
    // Predicated region
    $region6: #{base_transformer_forward.5} parent=1 // pred_check
      _
    $region7: #{base_transformer_forward.5} parent=1 // pred_check_branch
      %13 = sbr.rel (0) target = $region9
    $region8: #{base_transformer_forward.5} parent=1 // pred_region
      _
    $region9: #{base_transformer_forward.5} parent=1 // pred_fallthru
      _
    // Predicated region
    $region10: #{base_transformer_forward.5} parent=1 // pred_check
      _
    $region11: #{base_transformer_forward.5} parent=1 // pred_check_branch
      %15 = sbr.rel (0) target = $region13
    $region12: #{base_transformer_forward.5} parent=1 // pred_region
      %17 = vsyncadd [#allocation3], 0
      %s18 = sshll.u32 %s2, 4
      %s19 = int_to_ptr.hbm [resolvable:$true] %s18
      %s20 = sshll.u32 [#allocation2], 4
      %s21 = int_to_ptr.vmem [resolvable:$true] %s20
      %26 = dma.hbm_to_vmem [thread:$0]  %s19, 2048, %s21, [#allocation3], 128, 128, 8
    $region13: #{base_transformer_forward.5} parent=1 // pred_fallthru
      _
    // Predicated region
    $region14: #{base_transformer_forward.5} parent=1 // pred_check
      _
    $region15: #{base_transformer_forward.5} parent=1 // pred_check_branch
      %28 = sbr.rel (0) target = $region17
    $region16: #{base_transformer_forward.5} parent=1 // pred_region
      %30 = dma.done [#allocation3], 2048
    $region17: #{base_transformer_forward.5} parent=1 // pred_fallthru
      _
    %v31 = vld [vmem:[%s0] sm:$0xff]
    %v32 = vld [vmem:[%s0 + $0x8] sm:$0xff]
    %v33 = vld [vmem:[%s0 + $0x10] sm:$0xff]
    %v34 = vld [vmem:[%s0 + $0x18] sm:$0xff]
    %v35 = vmul.f32 %v31, %v31
    %v36 = vmul.f32 %v32, %v32
    %v37 = vmul.f32 %v33, %v33
    %v38 = vmul.f32 %v34, %v34
    %39 = vadd.xlane.f32.xlu0 %v35
    %v40 = vpop.xlane.xlu0 %39
    %41 = vadd.xlane.f32.xlu0 %v36
    %v42 = vpop.xlane.xlu0 %41
    %43 = vadd.xlane.f32.xlu0 %v37
    %v44 = vpop.xlane.xlu0 %43
    %45 = vadd.xlane.f32.xlu0 %v38
    %v46 = vpop.xlane.xlu0 %45
    %v47 = vrcp.pop 128.0
    %v48 = vmul.f32 128.0, %v47
    %v49 = vsub.f32 1.0, %v48
    %v50 = vmul.f32 %v47, %v49
    %v51 = vadd.f32 %v47, %v50
    %vm52 = vweird.f32 %v47
    %v53 = vsel %vm52, %v47, %v51
    %v54 = vmul.f32 %v40, %v53
    %v55 = vmul.f32 %v42, %v53
    %v56 = vmul.f32 %v44, %v53
    %v57 = vmul.f32 %v46, %v53
    %v58 = vadd.f32 %v54, 1e-05
    %v59 = vadd.f32 %v55, 1e-05
    %v60 = vadd.f32 %v56, 1e-05
    %v61 = vadd.f32 %v57, 1e-05
    %v62 = vrsqrt.pop %v58
    %v63 = vmul.f32 %v62, %v58
    %v64 = vmul.f32 %v63, %v62
    %v65 = vmul.f32 0.5, %v64
    %v66 = vsub.f32 1.5, %v65
    %v67 = vmul.f32 %v62, %v66
    %vm68 = vweird.f32 %v58
    %vm69 = vweird.f32 %v62
    %vm70 = vmor %vm68, %vm69
    %v71 = vsel %vm70, %v62, %v67
    %v72 = vrsqrt.pop %v59
    %v73 = vmul.f32 %v72, %v59
    %v74 = vmul.f32 %v73, %v72
    %v75 = vmul.f32 0.5, %v74
    %v76 = vsub.f32 1.5, %v75
    %v77 = vmul.f32 %v72, %v76
    %vm78 = vweird.f32 %v59
    %vm79 = vweird.f32 %v72
    %vm80 = vmor %vm78, %vm79
    %v81 = vsel %vm80, %v72, %v77
    %v82 = vrsqrt.pop %v60
    %v83 = vmul.f32 %v82, %v60
    %v84 = vmul.f32 %v83, %v82
    %v85 = vmul.f32 0.5, %v84
    %v86 = vsub.f32 1.5, %v85
    %v87 = vmul.f32 %v82, %v86
    %vm88 = vweird.f32 %v60
    %vm89 = vweird.f32 %v82
    %vm90 = vmor %vm88, %vm89
    %v91 = vsel %vm90, %v82, %v87
    %v92 = vrsqrt.pop %v61
    %v93 = vmul.f32 %v92, %v61
    %v94 = vmul.f32 %v93, %v92
    %v95 = vmul.f32 0.5, %v94
    %v96 = vsub.f32 1.5, %v95
    %v97 = vmul.f32 %v92, %v96
    %vm98 = vweird.f32 %v61
    %vm99 = vweird.f32 %v92
    %vm100 = vmor %vm98, %vm99
    %v101 = vsel %vm100, %v92, %v97
    %v102 = vmul.f32 %v31, %v71
    %v103 = vmul.f32 %v32, %v81
    %v104 = vmul.f32 %v33, %v91
    %v105 = vmul.f32 %v34, %v101
    %v106 = vld [vmem:[%s1] sm:$0x1]
    %v108 = vperm.slane %v106, 0
    %v110 = vmul.f32 %v102, %v108
    %v111 = vmul.f32 %v103, %v108
    %v112 = vmul.f32 %v104, %v108
    %v113 = vmul.f32 %v105, %v108
    %v114 = vpack.c.bf16 %v111, %v110
    %v115 = vpack.c.bf16 %v113, %v112
    %v116 = vld [vmem:[#allocation2] sm:$0xff]
    %v117 = vld [vmem:[#allocation2 + $0x8] sm:$0xff]
    %v118 = vld [vmem:[#allocation2 + $0x10] sm:$0xff]
    %v119 = vld [vmem:[#allocation2 + $0x18] sm:$0xff]
    %v120 = vld [vmem:[#allocation2 + $0x20] sm:$0xff]
    %v121 = vld [vmem:[#allocation2 + $0x28] sm:$0xff]
    %v122 = vld [vmem:[#allocation2 + $0x30] sm:$0xff]
    %v123 = vld [vmem:[#allocation2 + $0x38] sm:$0xff]
    %v124 = vld [vmem:[#allocation2 + $0x40] sm:$0xff]
    %v125 = vld [vmem:[#allocation2 + $0x48] sm:$0xff]
    %v126 = vld [vmem:[#allocation2 + $0x50] sm:$0xff]
    %v127 = vld [vmem:[#allocation2 + $0x58] sm:$0xff]
    %v128 = vld [vmem:[#allocation2 + $0x60] sm:$0xff]
    %v129 = vld [vmem:[#allocation2 + $0x68] sm:$0xff]
    %v130 = vld [vmem:[#allocation2 + $0x70] sm:$0xff]
    %v131 = vld [vmem:[#allocation2 + $0x78] sm:$0xff]
    %v148 = vunpack.c.l.b16 %v116
    %v149 = vunpack.c.h.b16 %v116
    %v150 = vunpack.c.l.b16 %v117
    %v151 = vunpack.c.h.b16 %v117
    %v152 = vunpack.c.l.b16 %v118
    %v153 = vunpack.c.h.b16 %v118
    %v154 = vunpack.c.l.b16 %v119
    %v155 = vunpack.c.h.b16 %v119
    %v156 = vunpack.c.l.b16 %v120
    %v157 = vunpack.c.h.b16 %v120
    %v158 = vunpack.c.l.b16 %v121
    %v159 = vunpack.c.h.b16 %v121
    %v160 = vunpack.c.l.b16 %v122
    %v161 = vunpack.c.h.b16 %v122
    %v162 = vunpack.c.l.b16 %v123
    %v163 = vunpack.c.h.b16 %v123
    %v164 = vunpack.c.l.b16 %v124
    %v165 = vunpack.c.h.b16 %v124
    %v166 = vunpack.c.l.b16 %v125
    %v167 = vunpack.c.h.b16 %v125
    %v168 = vunpack.c.l.b16 %v126
    %v169 = vunpack.c.h.b16 %v126
    %v170 = vunpack.c.l.b16 %v127
    %v171 = vunpack.c.h.b16 %v127
    %v172 = vunpack.c.l.b16 %v128
    %v173 = vunpack.c.h.b16 %v128
    %v174 = vunpack.c.l.b16 %v129
    %v175 = vunpack.c.h.b16 %v129
    %v176 = vunpack.c.l.b16 %v130
    %v177 = vunpack.c.h.b16 %v130
    %v178 = vunpack.c.l.b16 %v131
    %v179 = vunpack.c.h.b16 %v131
    %v180 = vpack.c.b16 %v150, %v148
    %v181 = vpack.c.b16 %v151, %v149
    %v182 = vpack.c.b16 %v154, %v152
    %v183 = vpack.c.b16 %v155, %v153
    %v184 = vpack.c.b16 %v158, %v156
    %v185 = vpack.c.b16 %v159, %v157
    %v186 = vpack.c.b16 %v162, %v160
    %v187 = vpack.c.b16 %v163, %v161
    %v188 = vpack.c.b16 %v166, %v164
    %v189 = vpack.c.b16 %v167, %v165
    %v190 = vpack.c.b16 %v170, %v168
    %v191 = vpack.c.b16 %v171, %v169
    %v192 = vpack.c.b16 %v174, %v172
    %v193 = vpack.c.b16 %v175, %v173
    %v194 = vpack.c.b16 %v178, %v176
    %v195 = vpack.c.b16 %v179, %v177
    %212 = vmatpush.bf16.msra.mxu0 %v194
    %213 = vmatpush.bf16.msra.mxu0 %v192
    %214 = vmatpush.bf16.msra.mxu0 %v190
    %215 = vmatpush.bf16.msra.mxu0 %v188
    %216 = vmatpush.bf16.msra.mxu0 %v186
    %217 = vmatpush.bf16.msra.mxu0 %v184
    %218 = vmatpush.bf16.msra.mxu0 %v182
    %219 = vmatpush.bf16.msra.mxu0 %v180
    %220 = vmatmul.bf16.gmra.mxu0 %v114
    %v221 = vpop.f32.mrf.mxu0
    %v222 = vadd.f32 0.0, %v221
    %v223 = vpop.f32.mrf.mxu0
    %v224 = vadd.f32 0.0, %v223
    %225 = vmatmul.bf16.gmra.mxu0 %v115
    %v226 = vpop.f32.mrf.mxu0
    %v227 = vadd.f32 0.0, %v226
    %v228 = vpop.f32.mrf.mxu0
    %v229 = vadd.f32 0.0, %v228
    %230 = vdwg.mxu0
    %231 = vmatpush.bf16.msra.mxu0 %v195
    %232 = vmatpush.bf16.msra.mxu0 %v193
    %233 = vmatpush.bf16.msra.mxu0 %v191
    %234 = vmatpush.bf16.msra.mxu0 %v189
    %235 = vmatpush.bf16.msra.mxu0 %v187
    %236 = vmatpush.bf16.msra.mxu0 %v185
    %237 = vmatpush.bf16.msra.mxu0 %v183
    %238 = vmatpush.bf16.msra.mxu0 %v181
    %239 = vmatmul.bf16.gmra.mxu0 %v114
    %v240 = vpop.f32.mrf.mxu0
    %v241 = vadd.f32 0.0, %v240
    %v242 = vpop.f32.mrf.mxu0
    %v243 = vadd.f32 0.0, %v242
    %244 = vmatmul.bf16.gmra.mxu0 %v115
    %v245 = vpop.f32.mrf.mxu0
    %v246 = vadd.f32 0.0, %v245
    %v247 = vpop.f32.mrf.mxu0
    %v248 = vadd.f32 0.0, %v247
    %249 = vdwg.mxu0
    %250 = vst [vmem:[#allocation5] sm:$0xff] %v222
    %251 = vst [vmem:[#allocation5 + $0x8] sm:$0xff] %v241
    %252 = vst [vmem:[#allocation5 + $0x10] sm:$0xff] %v224
    %253 = vst [vmem:[#allocation5 + $0x18] sm:$0xff] %v243
    %254 = vst [vmem:[#allocation5 + $0x20] sm:$0xff] %v227
    %255 = vst [vmem:[#allocation5 + $0x28] sm:$0xff] %v246
    %256 = vst [vmem:[#allocation5 + $0x30] sm:$0xff] %v229
    %257 = vst [vmem:[#allocation5 + $0x38] sm:$0xff] %v248
    // Predicated region
    $region18: #{base_transformer_forward.5} parent=1 // pred_check
      _
    $region19: #{base_transformer_forward.5} parent=1 // pred_check_branch
      %259 = sbr.rel (0) target = $region21
    $region20: #{base_transformer_forward.5} parent=1 // pred_region
      %261 = vsyncadd [#allocation4], 0
      %s262 = sshll.u32 [#allocation5], 4
      %s263 = int_to_ptr.vmem [resolvable:$true] %s262
      %s264 = sshll.u32 %s3, 4
      %s265 = int_to_ptr.hbm [resolvable:$true] %s264
      %270 = dma.vmem_to_hbm [thread:$0]  %s263, 1024, %s265, [#allocation4], 256, 256, 16
    $region21: #{base_transformer_forward.5} parent=1 // pred_fallthru
      _
    // Predicated region
    $region22: #{base_transformer_forward.5} parent=1 // pred_check
      _
    $region23: #{base_transformer_forward.5} parent=1 // pred_check_branch
      %272 = sbr.rel (0) target = $region25
    $region24: #{base_transformer_forward.5} parent=1 // pred_region
      %274 = dma.done [#allocation4], 1024
    $region25: #{base_transformer_forward.5} parent=1 // pred_fallthru
      _
    %275 = vsyncpa [#allocation3], 1
    %276 = vsyncpa [#allocation4], 1

// kernel: base_transformer_forward.3
$region0: #{base_transformer_forward.3}
  #allocation0 [shape = 'u32[]', space=smem, size = 0x4, offset = 0x4, fixed_abs, tag = 'smem constant byte address 0x4 - core index']
  #allocation1 [shape = 'u32[72,128]{1,0:T(1,128)}', space=vmem, size = 0x9000, scoped, tag = 'internal scratch']
  %s0 = inlined_call_operand.vmem [shape: f32[2,16,128], index: 0, kind: input, shape index: {}]
  %s1 = inlined_call_operand.vmem [shape: f32[16,128], index: 1, kind: input, shape index: {}]
  %s2 = inlined_call_operand.vmem [shape: f32[16,128], index: 2, kind: input, shape index: {}]
  %s3 = inlined_call_operand.hbm [shape: bf16[128,128], index: 3, kind: input, shape index: {}]
  %s4 = inlined_call_operand.vmem [shape: f32[1,128], index: 4, kind: input, shape index: {}]
  %s5 = inlined_call_operand.vmem [shape: bf16[128,384], index: 5, kind: input, shape index: {}]
  %s6 = inlined_call_operand.hbm [shape: bf16[128,128], index: 6, kind: input, shape index: {}]
  %s7 = inlined_call_operand.vmem [shape: f32[1,128], index: 7, kind: input, shape index: {}]
  %s8 = inlined_call_operand.vmem [shape: bf16[128,512], index: 8, kind: input, shape index: {}]
  %s9 = inlined_call_operand.hbm [shape: bf16[256,128], index: 9, kind: input, shape index: {}]
  %s10 = inlined_call_operand.vmem [shape: f32[2,16,128], index: 10, kind: output, shape index: {}]
  %s11 = sld [smem:[#allocation0]]
  $region85: #{base_transformer_forward.3} parent=0
    _
  %s13 = ssub.s32 1, %s11
  %s14 = scalar_select 0, %s13, %s11
  $region1: #{base_transformer_forward.3} parent=0
    #allocation2 [shape = 'u8[32768]{0}', space=vmem, size = 0x8000, scoped, tag = 'input window, operand 3, single buffered']
    #allocation3 [shape = 's32[2]{0}', space=sflag, size = 0x8, scoped, tag = 'scoped memory for base_transformer_forward.3']
    #allocation4 [shape = 'u8[32768]{0}', space=vmem, size = 0x8000, scoped, tag = 'input window, operand 6, single buffered']
    #allocation5 [shape = 's32[1]{0}', space=sflag, size = 0x4, scoped, tag = 'scoped memory for base_transformer_forward.3']
    #allocation6 [shape = 'u8[65536]{0}', space=vmem, size = 0x10000, scoped, tag = 'input window, operand 9, single buffered']
    %15 = vsyncpa [#allocation3], 0
    %16 = vsyncpa [#allocation5], 0
    loop: start=0, step=1, limit=4
    $region2: #{base_transformer_forward.3} parent=1 // loop_pre_header
      _
    $region3: #{base_transformer_forward.3} parent=1 // loop_header
      %s18 = sphi 0, %s22
      %p19 = scmp.ge.s32.totalorder %s18, 4
      %s28 = sphi 0, %s30
      %s31 = sphi 0, %s28
      %s32 = sphi 0, %s31
      %s48 = sphi 0, %s32
      %s52 = sphi 0, %s52
      %s54 = sphi 0, %s52
      %s55 = sphi 0, %s54
      %s69 = sphi 0, %s55
      %s73 = sphi 0, %s73
      %s75 = sphi 0, %s73
      %s76 = sphi 0, %s75
      %s90 = sphi 0, %s76
      %s94 = sphi 0, %s94
      %s96 = sphi 0, %s94
      %s97 = sphi 0, %s96
      %s111 = sphi 0, %s97
      %s115 = sphi 0, %s115
      %s117 = sphi 0, %s115
      %s118 = sphi 0, %s117
      %s132 = sphi 0, %s118
      %s136 = sphi 0, %s136
      %s138 = sphi 0, %s136
      %s139 = sphi 0, %s138
      %s153 = sphi 0, %s139
      %s157 = sphi 0, %s157
      %s159 = sphi 0, %s157
      %s160 = sphi 0, %s159
      %s174 = sphi 0, %s160
      %s178 = sphi 0, %s178
      %s180 = sphi 0, %s178
      %s181 = sphi 0, %s180
      %s195 = sphi 0, %s181
      %s199 = sphi 0, %s199
      %s201 = sphi 0, %s199
      %s202 = sphi 0, %s201
      %s216 = sphi 0, %s202
      %s220 = sphi 0, %s220
      %s222 = sphi 0, %s220
      %s223 = sphi 0, %s222
      %s237 = sphi 0, %s223
      %s243 = sphi 0, %s245
      %s246 = sphi 0, %s243
      %s247 = sphi 0, %s246
      %s263 = sphi 0, %s247
    $region4: #{base_transformer_forward.3} parent=1 // loop_header_branch
      %21 = sbr.rel (%p19) target = $region8
    $region5: #{base_transformer_forward.3} parent=1 // loop_body
      %s23 = ssub.s32 %s18, 1
      %s24 = ssub.s32 %s18, 2
      %s25 = sadd.s32 %s18, 1
      %s26 = ssub.s32 %s18, %s25
      %p27 = scmp.eq.s32.totalorder %s26, 0
      %s29 = sadd.s32 %s28, 1
      %s30 = scalar_select %p27, %s28, %s29
      %p33 = pneg %p27
      %p34 = scmp.eq.s32.totalorder %s18, 1
      %p35 = por %p33, %p34
      %p36 = scmp.ne.s32.totalorder %s28, %s31
      %p37 = scmp.eq.s32.totalorder %s18, 0
      %p38 = por %p36, %p37
      %p39 = scmp.ne.s32.totalorder %s28, %s31
      %p40 = scmp.eq.s32.totalorder %s23, 1
      %p41 = por %p39, %p40
      %p42 = scmp.ne.s32.totalorder %s31, %s32
      %p43 = scmp.eq.s32.totalorder %s23, 0
      %p44 = por %p42, %p43
      %p45 = scmp.ne.s32.totalorder %s31, %s32
      %p46 = scmp.eq.s32.totalorder %s24, 1
      %p47 = por %p45, %p46
      %p49 = scmp.ne.s32.totalorder %s32, %s48
      %p50 = scmp.eq.s32.totalorder %s24, 0
      %p51 = por %p49, %p50
      %s53 = sadd.s32 %s52, 1
      %p56 = scmp.eq.s32.totalorder %s18, 1
      %p57 = scmp.ne.s32.totalorder %s52, %s54
      %p58 = scmp.eq.s32.totalorder %s18, 0
      %p59 = por %p57, %p58
      %p60 = scmp.ne.s32.totalorder %s52, %s54
      %p61 = scmp.eq.s32.totalorder %s23, 1
      %p62 = por %p60, %p61
      %p63 = scmp.ne.s32.totalorder %s54, %s55
      %p64 = scmp.eq.s32.totalorder %s23, 0
      %p65 = por %p63, %p64
      %p66 = scmp.ne.s32.totalorder %s54, %s55
      %p67 = scmp.eq.s32.totalorder %s24, 1
      %p68 = por %p66, %p67
      %p70 = scmp.ne.s32.totalorder %s55, %s69
      %p71 = scmp.eq.s32.totalorder %s24, 0
      %p72 = por %p70, %p71
      %s74 = sadd.s32 %s73, 1
      %p77 = scmp.eq.s32.totalorder %s18, 1
      %p78 = scmp.ne.s32.totalorder %s73, %s75
      %p79 = scmp.eq.s32.totalorder %s18, 0
      %p80 = por %p78, %p79
      %p81 = scmp.ne.s32.totalorder %s73, %s75
      %p82 = scmp.eq.s32.totalorder %s23, 1
      %p83 = por %p81, %p82
      %p84 = scmp.ne.s32.totalorder %s75, %s76
      %p85 = scmp.eq.s32.totalorder %s23, 0
      %p86 = por %p84, %p85
      %p87 = scmp.ne.s32.totalorder %s75, %s76
      %p88 = scmp.eq.s32.totalorder %s24, 1
      %p89 = por %p87, %p88
      %p91 = scmp.ne.s32.totalorder %s76, %s90
      %p92 = scmp.eq.s32.totalorder %s24, 0
      %p93 = por %p91, %p92
      %s95 = sadd.s32 %s94, 1
      %p98 = scmp.eq.s32.totalorder %s18, 1
      %p99 = scmp.ne.s32.totalorder %s94, %s96
      %p100 = scmp.eq.s32.totalorder %s18, 0
      %p101 = por %p99, %p100
      %p102 = scmp.ne.s32.totalorder %s94, %s96
      %p103 = scmp.eq.s32.totalorder %s23, 1
      %p104 = por %p102, %p103
      %p105 = scmp.ne.s32.totalorder %s96, %s97
      %p106 = scmp.eq.s32.totalorder %s23, 0
      %p107 = por %p105, %p106
      %p108 = scmp.ne.s32.totalorder %s96, %s97
      %p109 = scmp.eq.s32.totalorder %s24, 1
      %p110 = por %p108, %p109
      %p112 = scmp.ne.s32.totalorder %s97, %s111
      %p113 = scmp.eq.s32.totalorder %s24, 0
      %p114 = por %p112, %p113
      %s116 = sadd.s32 %s115, 1
      %p119 = scmp.eq.s32.totalorder %s18, 1
      %p120 = scmp.ne.s32.totalorder %s115, %s117
      %p121 = scmp.eq.s32.totalorder %s18, 0
      %p122 = por %p120, %p121
      %p123 = scmp.ne.s32.totalorder %s115, %s117
      %p124 = scmp.eq.s32.totalorder %s23, 1
      %p125 = por %p123, %p124
      %p126 = scmp.ne.s32.totalorder %s117, %s118
      %p127 = scmp.eq.s32.totalorder %s23, 0
      %p128 = por %p126, %p127
      %p129 = scmp.ne.s32.totalorder %s117, %s118
      %p130 = scmp.eq.s32.totalorder %s24, 1
      %p131 = por %p129, %p130
      %p133 = scmp.ne.s32.totalorder %s118, %s132
      %p134 = scmp.eq.s32.totalorder %s24, 0
      %p135 = por %p133, %p134
      %s137 = sadd.s32 %s136, 1
      %p140 = scmp.eq.s32.totalorder %s18, 1
      %p141 = scmp.ne.s32.totalorder %s136, %s138
      %p142 = scmp.eq.s32.totalorder %s18, 0
      %p143 = por %p141, %p142
      %p144 = scmp.ne.s32.totalorder %s136, %s138
      %p145 = scmp.eq.s32.totalorder %s23, 1
      %p146 = por %p144, %p145
      %p147 = scmp.ne.s32.totalorder %s138, %s139
      %p148 = scmp.eq.s32.totalorder %s23, 0
      %p149 = por %p147, %p148
      %p150 = scmp.ne.s32.totalorder %s138, %s139
      %p151 = scmp.eq.s32.totalorder %s24, 1
      %p152 = por %p150, %p151
      %p154 = scmp.ne.s32.totalorder %s139, %s153
      %p155 = scmp.eq.s32.totalorder %s24, 0
      %p156 = por %p154, %p155
      %s158 = sadd.s32 %s157, 1
      %p161 = scmp.eq.s32.totalorder %s18, 1
      %p162 = scmp.ne.s32.totalorder %s157, %s159
      %p163 = scmp.eq.s32.totalorder %s18, 0
      %p164 = por %p162, %p163
      %p165 = scmp.ne.s32.totalorder %s157, %s159
      %p166 = scmp.eq.s32.totalorder %s23, 1
      %p167 = por %p165, %p166
      %p168 = scmp.ne.s32.totalorder %s159, %s160
      %p169 = scmp.eq.s32.totalorder %s23, 0
      %p170 = por %p168, %p169
      %p171 = scmp.ne.s32.totalorder %s159, %s160
      %p172 = scmp.eq.s32.totalorder %s24, 1
      %p173 = por %p171, %p172
      %p175 = scmp.ne.s32.totalorder %s160, %s174
      %p176 = scmp.eq.s32.totalorder %s24, 0
      %p177 = por %p175, %p176
      %s179 = sadd.s32 %s178, 1
      %p182 = scmp.eq.s32.totalorder %s18, 1
      %p183 = scmp.ne.s32.totalorder %s178, %s180
      %p184 = scmp.eq.s32.totalorder %s18, 0
      %p185 = por %p183, %p184
      %p186 = scmp.ne.s32.totalorder %s178, %s180
      %p187 = scmp.eq.s32.totalorder %s23, 1
      %p188 = por %p186, %p187
      %p189 = scmp.ne.s32.totalorder %s180, %s181
      %p190 = scmp.eq.s32.totalorder %s23, 0
      %p191 = por %p189, %p190
      %p192 = scmp.ne.s32.totalorder %s180, %s181
      %p193 = scmp.eq.s32.totalorder %s24, 1
      %p194 = por %p192, %p193
      %p196 = scmp.ne.s32.totalorder %s181, %s195
      %p197 = scmp.eq.s32.totalorder %s24, 0
      %p198 = por %p196, %p197
      %s200 = sadd.s32 %s199, 1
      %p203 = scmp.eq.s32.totalorder %s18, 1
      %p204 = scmp.ne.s32.totalorder %s199, %s201
      %p205 = scmp.eq.s32.totalorder %s18, 0
      %p206 = por %p204, %p205
      %p207 = scmp.ne.s32.totalorder %s199, %s201
      %p208 = scmp.eq.s32.totalorder %s23, 1
      %p209 = por %p207, %p208
      %p210 = scmp.ne.s32.totalorder %s201, %s202
      %p211 = scmp.eq.s32.totalorder %s23, 0
      %p212 = por %p210, %p211
      %p213 = scmp.ne.s32.totalorder %s201, %s202
      %p214 = scmp.eq.s32.totalorder %s24, 1
      %p215 = por %p213, %p214
      %p217 = scmp.ne.s32.totalorder %s202, %s216
      %p218 = scmp.eq.s32.totalorder %s24, 0
      %p219 = por %p217, %p218
      %s221 = sadd.s32 %s220, 1
      %p224 = scmp.eq.s32.totalorder %s18, 1
      %p225 = scmp.ne.s32.totalorder %s220, %s222
      %p226 = scmp.eq.s32.totalorder %s18, 0
      %p227 = por %p225, %p226
      %p228 = scmp.ne.s32.totalorder %s220, %s222
      %p229 = scmp.eq.s32.totalorder %s23, 1
      %p230 = por %p228, %p229
      %p231 = scmp.ne.s32.totalorder %s222, %s223
      %p232 = scmp.eq.s32.totalorder %s23, 0
      %p233 = por %p231, %p232
      %p234 = scmp.ne.s32.totalorder %s222, %s223
      %p235 = scmp.eq.s32.totalorder %s24, 1
      %p236 = por %p234, %p235
      %p238 = scmp.ne.s32.totalorder %s223, %s237
      %p239 = scmp.eq.s32.totalorder %s24, 0
      %p240 = por %p238, %p239
      %s241 = ssub.s32 %s18, %s25
      %p242 = scmp.eq.s32.totalorder %s241, 0
      %s244 = sadd.s32 %s243, 1
      %s245 = scalar_select %p242, %s243, %s244
      %p248 = pneg %p242
      %p249 = scmp.eq.s32.totalorder %s18, 1
      %p250 = por %p248, %p249
      %p251 = scmp.ne.s32.totalorder %s243, %s246
      %p252 = scmp.eq.s32.totalorder %s18, 0
      %p253 = por %p251, %p252
      %p254 = scmp.ne.s32.totalorder %s243, %s246
      %p255 = scmp.eq.s32.totalorder %s23, 1
      %p256 = por %p254, %p255
      %p257 = scmp.ne.s32.totalorder %s246, %s247
      %p258 = scmp.eq.s32.totalorder %s23, 0
      %p259 = por %p257, %p258
      %p260 = scmp.ne.s32.totalorder %s246, %s247
      %p261 = scmp.eq.s32.totalorder %s24, 1
      %p262 = por %p260, %p261
      %p264 = scmp.ne.s32.totalorder %s247, %s263
      %p265 = scmp.eq.s32.totalorder %s24, 0
      %p266 = por %p264, %p265
      %p267 = scmp.le.s32.totalorder 1, %s18
      %p268 = scmp.lt.s32.totalorder %s18, 3
      %p269 = pnand %p267, %p268
      %p270 = pneg %p269
      // Predicated region
      $region9: #{base_transformer_forward.3} parent=5 // pred_check
        _
      $region10: #{base_transformer_forward.3} parent=5 // pred_check_branch
        %272 = sbr.rel (%p269) target = $region12
      $region11: #{base_transformer_forward.3} parent=5 // pred_region
        %s273 = ssub.s32 %s18, 1
        // Predicated region
        $region13: #{base_transformer_forward.3} parent=11 // pred_check
          %p274 = pneg %p65
        $region14: #{base_transformer_forward.3} parent=11 // pred_check_branch
          %276 = sbr.rel (%p274) target = $region16
        $region15: #{base_transformer_forward.3} parent=11 // pred_region
          _
        $region16: #{base_transformer_forward.3} parent=11 // pred_fallthru
          _
        // Predicated region
        $region17: #{base_transformer_forward.3} parent=11 // pred_check
          %p277 = pneg %p86
        $region18: #{base_transformer_forward.3} parent=11 // pred_check_branch
          %279 = sbr.rel (%p277) target = $region20
        $region19: #{base_transformer_forward.3} parent=11 // pred_region
          _
        $region20: #{base_transformer_forward.3} parent=11 // pred_fallthru
          _
        // Predicated region
        $region21: #{base_transformer_forward.3} parent=11 // pred_check
          %p280 = pneg %p107
        $region22: #{base_transformer_forward.3} parent=11 // pred_check_branch
          %282 = sbr.rel (%p280) target = $region24
        $region23: #{base_transformer_forward.3} parent=11 // pred_region
          %284 = vsyncadd [#allocation3], 0
          %s285 = sshll.u32 %s3, 4
          %s286 = int_to_ptr.hbm [resolvable:$true] %s285
          %s287 = sshll.u32 [#allocation2], 4
          %s288 = int_to_ptr.vmem [resolvable:$true] %s287
          %293 = dma.hbm_to_vmem [thread:$0]  %s286, 1024, %s288, [#allocation3], 64, 64, 4
        $region24: #{base_transformer_forward.3} parent=11 // pred_fallthru
          _
        // Predicated region
        $region25: #{base_transformer_forward.3} parent=11 // pred_check
          %p294 = pneg %p128
        $region26: #{base_transformer_forward.3} parent=11 // pred_check_branch
          %296 = sbr.rel (%p294) target = $region28
        $region27: #{base_transformer_forward.3} parent=11 // pred_region
          _
        $region28: #{base_transformer_forward.3} parent=11 // pred_fallthru
          _
        // Predicated region
        $region29: #{base_transformer_forward.3} parent=11 // pred_check
          %p297 = pneg %p149
        $region30: #{base_transformer_forward.3} parent=11 // pred_check_branch
          %299 = sbr.rel (%p297) target = $region32
        $region31: #{base_transformer_forward.3} parent=11 // pred_region
          _
        $region32: #{base_transformer_forward.3} parent=11 // pred_fallthru
          _
        // Predicated region
        $region33: #{base_transformer_forward.3} parent=11 // pred_check
          %p300 = pneg %p170
        $region34: #{base_transformer_forward.3} parent=11 // pred_check_branch
          %302 = sbr.rel (%p300) target = $region36
        $region35: #{base_transformer_forward.3} parent=11 // pred_region
          %304 = vsyncadd [#allocation5], 0
          %s305 = sshll.u32 %s6, 4
          %s306 = int_to_ptr.hbm [resolvable:$true] %s305
          %s307 = sshll.u32 [#allocation4], 4
          %s308 = int_to_ptr.vmem [resolvable:$true] %s307
          %313 = dma.hbm_to_vmem [thread:$0]  %s306, 1024, %s308, [#allocation5], 64, 64, 4
        $region36: #{base_transformer_forward.3} parent=11 // pred_fallthru
          _
        // Predicated region
        $region37: #{base_transformer_forward.3} parent=11 // pred_check
          %p314 = pneg %p191
        $region38: #{base_transformer_forward.3} parent=11 // pred_check_branch
          %316 = sbr.rel (%p314) target = $region40
        $region39: #{base_transformer_forward.3} parent=11 // pred_region
          _
        $region40: #{base_transformer_forward.3} parent=11 // pred_fallthru
          _
        // Predicated region
        $region41: #{base_transformer_forward.3} parent=11 // pred_check
          %p317 = pneg %p212
        $region42: #{base_transformer_forward.3} parent=11 // pred_check_branch
          %319 = sbr.rel (%p317) target = $region44
        $region43: #{base_transformer_forward.3} parent=11 // pred_region
          _
        $region44: #{base_transformer_forward.3} parent=11 // pred_fallthru
          _
        // Predicated region
        $region45: #{base_transformer_forward.3} parent=11 // pred_check
          %p320 = pneg %p233
        $region46: #{base_transformer_forward.3} parent=11 // pred_check_branch
          %322 = sbr.rel (%p320) target = $region48
        $region47: #{base_transformer_forward.3} parent=11 // pred_region
          %324 = vsyncadd [#allocation5], 0
          %s325 = sshll.u32 %s9, 4
          %s326 = int_to_ptr.hbm [resolvable:$true] %s325
          %s327 = sshll.u32 [#allocation6], 4
          %s328 = int_to_ptr.vmem [resolvable:$true] %s327
          %333 = dma.hbm_to_vmem [thread:$0]  %s326, 2048, %s328, [#allocation5], 64, 64, 4
        $region48: #{base_transformer_forward.3} parent=11 // pred_fallthru
          _
      $region12: #{base_transformer_forward.3} parent=5 // pred_fallthru
        _
      %p334 = scmp.lt.s32.totalorder %s18, 2
      // Predicated region
      $region49: #{base_transformer_forward.3} parent=5 // pred_check
        %p335 = pneg %p334
      $region50: #{base_transformer_forward.3} parent=5 // pred_check_branch
        %337 = sbr.rel (%p335) target = $region52
      $region51: #{base_transformer_forward.3} parent=5 // pred_region
        // Predicated region
        $region53: #{base_transformer_forward.3} parent=51 // pred_check
          %p338 = pneg %p38
        $region54: #{base_transformer_forward.3} parent=51 // pred_check_branch
          %340 = sbr.rel (%p338) target = $region56
        $region55: #{base_transformer_forward.3} parent=51 // pred_region
          %p341 = scmp.lt.s32.totalorder %s18, 1
          %s342 = scalar_select %p341, %s18, 1
          %s343 = smul.addr %s342, 2
          %s344 = smul.addr %s343, 8
          %s345 = scalar_lea.vmem %s0, %s344
        $region56: #{base_transformer_forward.3} parent=51 // pred_fallthru
          _
      $region52: #{base_transformer_forward.3} parent=5 // pred_fallthru
        _
      %p346 = scmp.le.s32.totalorder 1, %s18
      %p347 = scmp.lt.s32.totalorder %s18, 3
      %p348 = pnand %p346, %p347
      %p349 = pneg %p348
      // Predicated region
      $region57: #{base_transformer_forward.3} parent=5 // pred_check
        _
      $region58: #{base_transformer_forward.3} parent=5 // pred_check_branch
        %351 = sbr.rel (%p348) target = $region60
      $region59: #{base_transformer_forward.3} parent=5 // pred_region
        %s352 = ssub.s32 %s18, 1
        // Predicated region
        $region61: #{base_transformer_forward.3} parent=59 // pred_check
          %p353 = pneg %p107
        $region62: #{base_transformer_forward.3} parent=59 // pred_check_branch
          %355 = sbr.rel (%p353) target = $region64
        $region63: #{base_transformer_forward.3} parent=59 // pred_region
          %357 = dma.done [#allocation3], 1024
        $region64: #{base_transformer_forward.3} parent=59 // pred_fallthru
          _
        // Predicated region
        $region65: #{base_transformer_forward.3} parent=59 // pred_check
          %p358 = pneg %p170
        $region66: #{base_transformer_forward.3} parent=59 // pred_check_branch
          %360 = sbr.rel (%p358) target = $region68
        $region67: #{base_transformer_forward.3} parent=59 // pred_region
          %362 = dma.done [#allocation5], 1024
        $region68: #{base_transformer_forward.3} parent=59 // pred_fallthru
          _
        // Predicated region
        $region69: #{base_transformer_forward.3} parent=59 // pred_check
          %p363 = pneg %p233
        $region70: #{base_transformer_forward.3} parent=59 // pred_check_branch
          %365 = sbr.rel (%p363) target = $region72
        $region71: #{base_transformer_forward.3} parent=59 // pred_region
          %367 = dma.done [#allocation5], 2048
        $region72: #{base_transformer_forward.3} parent=59 // pred_fallthru
          _
        %p368 = scmp.lt.s32.totalorder %s23, 1
        %s369 = scalar_select %p368, %s23, 1
        %s370 = smul.addr %s369, 2
        %s371 = smul.addr %s370, 8
        %s372 = scalar_lea.vmem %s0, %s371
        %p373 = pneg %p44
        %p374 = pneg %p41
        %p375 = pneg %p65
        %p376 = pneg %p62
        %p377 = pneg %p86
        %p378 = pneg %p83
        %p379 = pneg %p107
        %p380 = pneg %p104
        %p381 = pneg %p128
        %p382 = pneg %p125
        %p383 = pneg %p149
        %p384 = pneg %p146
        %p385 = pneg %p170
        %p386 = pneg %p167
        %p387 = pneg %p191
        %p388 = pneg %p188
        %p389 = pneg %p212
        %p390 = pneg %p209
        %p391 = pneg %p233
        %p392 = pneg %p230
        %p393 = pneg %p259
        %p394 = pneg %p256
        %p395 = scmp.lt.s32.totalorder %s23, 1
        %s396 = scalar_select %p395, %s23, 1
        %s397 = smul.addr %s396, 2
        %s398 = smul.addr %s397, 8
        %s399 = scalar_lea.vmem %s10, %s398
        %p400 = scmp.lt.s32.totalorder %s23, 1
        %s401 = scalar_select %p400, %s23, 1
        %s402 = smul.addr %s401, 2
        %s403 = smul.addr %s402, 8
        %s404 = scalar_lea.vmem %s0, %s403
        %p405 = scmp.lt.s32.totalorder %s23, 1
        %s406 = scalar_select %p405, %s23, 1
        %s407 = smul.addr %s406, 2
        %s408 = smul.addr %s407, 8
        %s409 = scalar_lea.vmem %s10, %s408
        %v411 = vld [vmem:[%s404] sm:$0xff]
        %v412 = vld [vmem:[%s404 + $0x8] sm:$0xff]
        %v413 = vmul.f32 %v411, %v411
        %v414 = vmul.f32 %v412, %v412
        %415 = vadd.xlane.f32.xlu0 %v413
        %v416 = vpop.xlane.xlu0 %415
        %417 = vadd.xlane.f32.xlu0 %v414
        %v418 = vpop.xlane.xlu0 %417
        %v419 = vrcp.pop 128.0
        %v420 = vmul.f32 128.0, %v419
        %v421 = vsub.f32 1.0, %v420
        %v422 = vmul.f32 %v419, %v421
        %v423 = vadd.f32 %v419, %v422
        %vm424 = vweird.f32 %v419
        %v425 = vsel %vm424, %v419, %v423
        %v426 = vmul.f32 %v416, %v425
        %v427 = vmul.f32 %v418, %v425
        %v428 = vadd.f32 %v426, 1e-05
        %v429 = vadd.f32 %v427, 1e-05
        %v430 = vrsqrt.pop %v428
        %v431 = vmul.f32 %v430, %v428
        %v432 = vmul.f32 %v431, %v430
        %v433 = vmul.f32 0.5, %v432
        %v434 = vsub.f32 1.5, %v433
        %v435 = vmul.f32 %v430, %v434
        %vm436 = vweird.f32 %v428
        %vm437 = vweird.f32 %v430
        %vm438 = vmor %vm436, %vm437
        %v439 = vsel %vm438, %v430, %v435
        %v440 = vrsqrt.pop %v429
        %v441 = vmul.f32 %v440, %v429
        %v442 = vmul.f32 %v441, %v440
        %v443 = vmul.f32 0.5, %v442
        %v444 = vsub.f32 1.5, %v443
        %v445 = vmul.f32 %v440, %v444
        %vm446 = vweird.f32 %v429
        %vm447 = vweird.f32 %v440
        %vm448 = vmor %vm446, %vm447
        %v449 = vsel %vm448, %v440, %v445
        %v450 = vmul.f32 %v411, %v439
        %v451 = vmul.f32 %v412, %v449
        %v452 = vld [vmem:[%s4] sm:$0x1]
        %v454 = vperm.slane %v452, 0
        %v456 = vmul.f32 %v450, %v454
        %v457 = vmul.f32 %v451, %v454
        %v458 = vpack.c.bf16 %v457, %v456
        %v459 = vld [vmem:[%s5] sm:$0xff]
        %v460 = vld [vmem:[%s5 + $0x8] sm:$0xf]
        %v461 = vld [vmem:[%s5 + $0xc] sm:$0xff]
        %v462 = vld [vmem:[%s5 + $0x14] sm:$0xf]
        %v463 = vld [vmem:[%s5 + $0x18] sm:$0xff]
        %v464 = vld [vmem:[%s5 + $0x20] sm:$0xf]
        %v465 = vld [vmem:[%s5 + $0x24] sm:$0xff]
        %v466 = vld [vmem:[%s5 + $0x2c] sm:$0xf]
        %v467 = vld [vmem:[%s5 + $0x30] sm:$0xff]
        %v468 = vld [vmem:[%s5 + $0x38] sm:$0xf]
        %v469 = vld [vmem:[%s5 + $0x3c] sm:$0xff]
        %v470 = vld [vmem:[%s5 + $0x44] sm:$0xf]
        %v471 = vld [vmem:[%s5 + $0x48] sm:$0xff]
        %v472 = vld [vmem:[%s5 + $0x50] sm:$0xf]
        %v473 = vld [vmem:[%s5 + $0x54] sm:$0xff]
        %v474 = vld [vmem:[%s5 + $0x5c] sm:$0xf]
        %v475 = vld [vmem:[%s5 + $0x60] sm:$0xff]
        %v476 = vld [vmem:[%s5 + $0x68] sm:$0xf]
        %v477 = vld [vmem:[%s5 + $0x6c] sm:$0xff]
        %v478 = vld [vmem:[%s5 + $0x74] sm:$0xf]
        %v479 = vld [vmem:[%s5 + $0x78] sm:$0xff]
        %v480 = vld [vmem:[%s5 + $0x80] sm:$0xf]
        %v481 = vld [vmem:[%s5 + $0x84] sm:$0xff]
        %v482 = vld [vmem:[%s5 + $0x8c] sm:$0xf]
        %v483 = vld [vmem:[%s5 + $0x90] sm:$0xff]
        %v484 = vld [vmem:[%s5 + $0x98] sm:$0xf]
        %v485 = vld [vmem:[%s5 + $0x9c] sm:$0xff]
        %v486 = vld [vmem:[%s5 + $0xa4] sm:$0xf]
        %v487 = vld [vmem:[%s5 + $0xa8] sm:$0xff]
        %v488 = vld [vmem:[%s5 + $0xb0] sm:$0xf]
        %v489 = vld [vmem:[%s5 + $0xb4] sm:$0xff]
        %v490 = vld [vmem:[%s5 + $0xbc] sm:$0xf]
        %v523 = vunpack.c.l.b16 %v459
        %v524 = vunpack.c.h.b16 %v459
        %v525 = vunpack.c.l.b16 %v460
        %v526 = vunpack.c.l.b16 %v461
        %v527 = vunpack.c.h.b16 %v461
        %v528 = vunpack.c.l.b16 %v462
        %v529 = vunpack.c.l.b16 %v463
        %v530 = vunpack.c.h.b16 %v463
        %v531 = vunpack.c.l.b16 %v464
        %v532 = vunpack.c.l.b16 %v465
        %v533 = vunpack.c.h.b16 %v465
        %v534 = vunpack.c.l.b16 %v466
        %v535 = vunpack.c.l.b16 %v467
        %v536 = vunpack.c.h.b16 %v467
        %v537 = vunpack.c.l.b16 %v468
        %v538 = vunpack.c.l.b16 %v469
        %v539 = vunpack.c.h.b16 %v469
        %v540 = vunpack.c.l.b16 %v470
        %v541 = vunpack.c.l.b16 %v471
        %v542 = vunpack.c.h.b16 %v471
        %v543 = vunpack.c.l.b16 %v472
        %v544 = vunpack.c.l.b16 %v473
        %v545 = vunpack.c.h.b16 %v473
        %v546 = vunpack.c.l.b16 %v474
        %v547 = vunpack.c.l.b16 %v475
        %v548 = vunpack.c.h.b16 %v475
        %v549 = vunpack.c.l.b16 %v476
        %v550 = vunpack.c.l.b16 %v477
        %v551 = vunpack.c.h.b16 %v477
        %v552 = vunpack.c.l.b16 %v478
        %v553 = vunpack.c.l.b16 %v479
        %v554 = vunpack.c.h.b16 %v479
        %v555 = vunpack.c.l.b16 %v480
        %v556 = vunpack.c.l.b16 %v481
        %v557 = vunpack.c.h.b16 %v481
        %v558 = vunpack.c.l.b16 %v482
        %v559 = vunpack.c.l.b16 %v483
        %v560 = vunpack.c.h.b16 %v483
        %v561 = vunpack.c.l.b16 %v484
        %v562 = vunpack.c.l.b16 %v485
        %v563 = vunpack.c.h.b16 %v485
        %v564 = vunpack.c.l.b16 %v486
        %v565 = vunpack.c.l.b16 %v487
        %v566 = vunpack.c.h.b16 %v487
        %v567 = vunpack.c.l.b16 %v488
        %v568 = vunpack.c.l.b16 %v489
        %v569 = vunpack.c.h.b16 %v489
        %v570 = vunpack.c.l.b16 %v490
        %v571 = vpack.c.b16 %v526, %v523
        %v572 = vpack.c.b16 %v527, %v524
        %v573 = vpack.c.b16 %v528, %v525
        %v574 = vpack.c.b16 %v532, %v529
        %v575 = vpack.c.b16 %v533, %v530
        %v576 = vpack.c.b16 %v534, %v531
        %v577 = vpack.c.b16 %v538, %v535
        %v578 = vpack.c.b16 %v539, %v536
        %v579 = vpack.c.b16 %v540, %v537
        %v580 = vpack.c.b16 %v544, %v541
        %v581 = vpack.c.b16 %v545, %v542
        %v582 = vpack.c.b16 %v546, %v543
        %v583 = vpack.c.b16 %v550, %v547
        %v584 = vpack.c.b16 %v551, %v548
        %v585 = vpack.c.b16 %v552, %v549
        %v586 = vpack.c.b16 %v556, %v553
        %v587 = vpack.c.b16 %v557, %v554
        %v588 = vpack.c.b16 %v558, %v555
        %v589 = vpack.c.b16 %v562, %v559
        %v590 = vpack.c.b16 %v563, %v560
        %v591 = vpack.c.b16 %v564, %v561
        %v592 = vpack.c.b16 %v568, %v565
        %v593 = vpack.c.b16 %v569, %v566
        %v594 = vpack.c.b16 %v570, %v567
        %619 = vmatpush.bf16.msra.mxu0 %v592
        %620 = vmatpush.bf16.msra.mxu0 %v589
        %621 = vmatpush.bf16.msra.mxu0 %v586
        %622 = vmatpush.bf16.msra.mxu0 %v583
        %623 = vmatpush.bf16.msra.mxu0 %v580
        %624 = vmatpush.bf16.msra.mxu0 %v577
        %625 = vmatpush.bf16.msra.mxu0 %v574
        %626 = vmatpush.bf16.msra.mxu0 %v571
        %627 = vmatmul.bf16.gmra.mxu0 %v458
        %v628 = vpop.f32.mrf.mxu0
        %v629 = vadd.f32 0.0, %v628
        %v630 = vpop.f32.mrf.mxu0
        %v631 = vadd.f32 0.0, %v630
        %632 = vdwg.mxu0
        %633 = vmatpush.bf16.msra.mxu0 %v593
        %634 = vmatpush.bf16.msra.mxu0 %v590
        %635 = vmatpush.bf16.msra.mxu0 %v587
        %636 = vmatpush.bf16.msra.mxu0 %v584
        %637 = vmatpush.bf16.msra.mxu0 %v581
        %638 = vmatpush.bf16.msra.mxu0 %v578
        %639 = vmatpush.bf16.msra.mxu0 %v575
        %640 = vmatpush.bf16.msra.mxu0 %v572
        %641 = vmatmul.bf16.gmra.mxu0 %v458
        %v642 = vpop.f32.mrf.mxu0
        %v643 = vadd.f32 0.0, %v642
        %v644 = vpop.f32.mrf.mxu0
        %v645 = vadd.f32 0.0, %v644
        %646 = vdwg.mxu0
        %647 = vmatpush.bf16.msra.mxu0 %v594
        %648 = vmatpush.bf16.msra.mxu0 %v591
        %649 = vmatpush.bf16.msra.mxu0 %v588
        %650 = vmatpush.bf16.msra.mxu0 %v585
        %651 = vmatpush.bf16.msra.mxu0 %v582
        %652 = vmatpush.bf16.msra.mxu0 %v579
        %653 = vmatpush.bf16.msra.mxu0 %v576
        %654 = vmatpush.bf16.msra.mxu0 %v573
        %655 = vmatmul.bf16.gmra.mxu0 %v458
        %v656 = vpop.f32.mrf.mxu0
        %v657 = vadd.f32 0.0, %v656
        %v658 = vpop.f32.mrf.mxu0
        %v659 = vadd.f32 0.0, %v658
        %660 = vdwg.mxu0
        %v661 = vld [vmem:[%s1] sm:$0xff]
        %v662 = vld [vmem:[%s1 + $0x8] sm:$0xff]
        %v663 = vld [vmem:[%s2] sm:$0xff]
        %v664 = vld [vmem:[%s2 + $0x8] sm:$0xff]
        %v665 = vld [vmem:[#allocation2] sm:$0xf]
        %v666 = vld [vmem:[#allocation2 + $0x4] sm:$0xf]
        %v667 = vld [vmem:[#allocation2 + $0x8] sm:$0xf]
        %v668 = vld [vmem:[#allocation2 + $0xc] sm:$0xf]
        %v669 = vld [vmem:[#allocation2 + $0x10] sm:$0xf]
        %v670 = vld [vmem:[#allocation2 + $0x14] sm:$0xf]
        %v671 = vld [vmem:[#allocation2 + $0x18] sm:$0xf]
        %v672 = vld [vmem:[#allocation2 + $0x1c] sm:$0xf]
        %v673 = vld [vmem:[#allocation2 + $0x20] sm:$0xf]
        %v674 = vld [vmem:[#allocation2 + $0x24] sm:$0xf]
        %v675 = vld [vmem:[#allocation2 + $0x28] sm:$0xf]
        %v676 = vld [vmem:[#allocation2 + $0x2c] sm:$0xf]
        %v677 = vld [vmem:[#allocation2 + $0x30] sm:$0xf]
        %v678 = vld [vmem:[#allocation2 + $0x34] sm:$0xf]
        %v679 = vld [vmem:[#allocation2 + $0x38] sm:$0xf]
        %v680 = vld [vmem:[#allocation2 + $0x3c] sm:$0xf]
        %v681 = vpack.c.bf16 %v631, %v629
        %v698 = vunpack.c.l.b16 %v665
        %v699 = vunpack.c.l.b16 %v666
        %v700 = vunpack.c.l.b16 %v667
        %v701 = vunpack.c.l.b16 %v668
        %v702 = vunpack.c.l.b16 %v669
        %v703 = vunpack.c.l.b16 %v670
        %v704 = vunpack.c.l.b16 %v671
        %v705 = vunpack.c.l.b16 %v672
        %v706 = vunpack.c.l.b16 %v673
        %v707 = vunpack.c.l.b16 %v674
        %v708 = vunpack.c.l.b16 %v675
        %v709 = vunpack.c.l.b16 %v676
        %v710 = vunpack.c.l.b16 %v677
        %v711 = vunpack.c.l.b16 %v678
        %v712 = vunpack.c.l.b16 %v679
        %v713 = vunpack.c.l.b16 %v680
        %v714 = vpack.c.b16 %v699, %v698
        %v715 = vpack.c.b16 %v701, %v700
        %v716 = vpack.c.b16 %v703, %v702
        %v717 = vpack.c.b16 %v705, %v704
        %v718 = vpack.c.b16 %v707, %v706
        %v719 = vpack.c.b16 %v709, %v708
        %v720 = vpack.c.b16 %v711, %v710
        %v721 = vpack.c.b16 %v713, %v712
        %730 = vmatpush.bf16.msra.mxu0 %v721
        %731 = vmatpush.bf16.msra.mxu0 %v720
        %732 = vmatpush.bf16.msra.mxu0 %v719
        %733 = vmatpush.bf16.msra.mxu0 %v718
        %734 = vmatpush.bf16.msra.mxu0 %v717
        %735 = vmatpush.bf16.msra.mxu0 %v716
        %736 = vmatpush.bf16.msra.mxu0 %v715
        %737 = vmatpush.bf16.msra.mxu0 %v714
        %738 = vmatmul.bf16.gmra.mxu0 %v681
        %v739 = vpop.f32.mrf.mxu0
        %v740 = vadd.f32 0.0, %v739
        %v741 = vpop.f32.mrf.mxu0
        %v742 = vadd.f32 0.0, %v741
        %743 = vdwg.mxu0
        %v744 = vmul.f32 %v629, %v661
        %v745 = vmul.f32 %v631, %v662
        %v746 = vmul.f32 %v740, %v663
        %v747 = vmul.f32 %v742, %v664
        %v748 = vadd.f32 %v744, %v746
        %v749 = vadd.f32 %v745, %v747
        %v750 = vpack.c.bf16 %v645, %v643
        %751 = vmatpush.bf16.msra.mxu0 %v721
        %752 = vmatpush.bf16.msra.mxu0 %v720
        %753 = vmatpush.bf16.msra.mxu0 %v719
        %754 = vmatpush.bf16.msra.mxu0 %v718
        %755 = vmatpush.bf16.msra.mxu0 %v717
        %756 = vmatpush.bf16.msra.mxu0 %v716
        %757 = vmatpush.bf16.msra.mxu0 %v715
        %758 = vmatpush.bf16.msra.mxu0 %v714
        %759 = vmatmul.bf16.gmra.mxu0 %v750
        %v760 = vpop.f32.mrf.mxu0
        %v761 = vadd.f32 0.0, %v760
        %v762 = vpop.f32.mrf.mxu0
        %v763 = vadd.f32 0.0, %v762
        %764 = vdwg.mxu0
        %v765 = vmul.f32 %v643, %v661
        %v766 = vmul.f32 %v645, %v662
        %v767 = vmul.f32 %v761, %v663
        %v768 = vmul.f32 %v763, %v664
        %v769 = vadd.f32 %v765, %v767
        %v770 = vadd.f32 %v766, %v768
        %v771 = vpack.c.bf16 %v748, %v748
        %v772 = vpack.c.bf16 %v749, %v749
        %v773 = vpack.c.bf16 %v769, %v769
        %v774 = vpack.c.bf16 %v770, %v770
        %v775 = vpack.c.bf16 %v657, %v657
        %v776 = vpack.c.bf16 %v659, %v659
        %v777 = vlaneseq
        %v778 = vshrl.u32 %v777, 7
        %v779 = vadd.s32 %v778, 8
        %v780 = vlaneseq
        %v781 = vand.u32 %v780, 127
        %vm782 = vcmp.le.s32.totalorder %v781, %v778
        %vm783 = vcmp.le.s32.totalorder %v781, %v779
        %v786 = vunpack.c.l.b16 %v771
        %v787 = vunpack.c.l.b16 %v772
        %v788 = vpack.c.b16 %v787, %v786
        %v791 = vunpack.c.l.b16 %v773
        %v792 = vunpack.c.l.b16 %v774
        %v793 = vpack.c.b16 %v792, %v791
        %vm794 = vcmask 523264
        %v796 = vsel %vm794, %v788, 0
        %v799 = vsel %vm794, %v793, 0
        %801 = vmatpush.bf16.xpose.msra.mxu0 0
        %802 = vmatpush.bf16.xpose.msra.mxu0 0
        %803 = vmatpush.bf16.xpose.msra.mxu0 0
        %804 = vmatpush.bf16.xpose.msra.mxu0 0
        %805 = vmatpush.bf16.xpose.msra.mxu0 0
        %806 = vmatpush.bf16.xpose.msra.mxu0 0
        %807 = vmatpush.bf16.xpose.msra.mxu0 0
        %808 = vmatpush.bf16.xpose.msra.mxu0 %v799
        %809 = vmatmul.bf16.gmra.mxu0 %v796
        %v810 = vpop.f32.mrf.mxu0
        %v811 = vadd.f32 0.0, %v810
        %v812 = vpop.f32.mrf.mxu0
        %v813 = vadd.f32 0.0, %v812
        %814 = vdwg.mxu0
        %v815 = vmul.f32 %v811, 0.125
        %v816 = vmul.f32 %v813, 0.125
        %v817 = vsel %vm782, %v815, -1e+30
        %v818 = vsel %vm783, %v816, -1e+30
        %vm819 = vcmask 130048
        %v820 = vsel %vm819, %v817, -inf
        %821 = vmax.xlane.f32.xlu0 %v820
        %v822 = vpop.xlane.xlu0 %821
        %v823 = vsel %vm819, %v818, -inf
        %824 = vmax.xlane.f32.xlu0 %v823
        %v825 = vpop.xlane.xlu0 %824
        %v826 = vsub.f32 %v817, %v822
        %v827 = vsub.f32 %v818, %v825
        %v828 = vmul.f32 %v826, 1.442695
        %v829 = vpow.pop %v828
        %v830 = vmul.f32 %v827, 1.442695
        %v831 = vpow.pop %v830
        %v832 = vsel %vm819, %v829, 0.0
        %833 = vadd.xlane.f32.xlu0 %v832
        %v834 = vpop.xlane.xlu0 %833
        %v835 = vsel %vm819, %v831, 0.0
        %836 = vadd.xlane.f32.xlu0 %v835
        %v837 = vpop.xlane.xlu0 %836
        %v838 = vrcp.pop %v834
        %v839 = vrcp.pop %v837
        %v840 = vmul.f32 %v829, %v838
        %v841 = vmul.f32 %v831, %v839
        %v842 = vpack.c.bf16 %v841, %v840
        %v845 = vunpack.c.l.b16 %v775
        %v846 = vunpack.c.l.b16 %v776
        %v847 = vpack.c.b16 %v846, %v845
        %v850 = vsel %vm819, %v842, 0
        %852 = vmatpush.bf16.msra.mxu0 0
        %853 = vmatpush.bf16.msra.mxu0 0
        %854 = vmatpush.bf16.msra.mxu0 0
        %855 = vmatpush.bf16.msra.mxu0 0
        %856 = vmatpush.bf16.msra.mxu0 0
        %857 = vmatpush.bf16.msra.mxu0 0
        %858 = vmatpush.bf16.msra.mxu0 0
        %859 = vmatpush.bf16.msra.mxu0 %v847
        %860 = vmatmul.bf16.gmra.mxu0 %v850
        %v861 = vpop.f32.mrf.mxu0
        %v862 = vadd.f32 0.0, %v861
        %v863 = vpop.f32.mrf.mxu0
        %v864 = vadd.f32 0.0, %v863
        %865 = vdwg.mxu0
        %866 = vrot.lane.b32.xlu0 %v788, 64
        %v867 = vpop.permute.xlu0 %866
        %868 = vrot.lane.b32.xlu0 %v793, 64
        %v869 = vpop.permute.xlu0 %868
        %v871 = vsel %vm794, %v867, 0
        %v874 = vsel %vm794, %v869, 0
        %876 = vmatpush.bf16.xpose.msra.mxu0 0
        %877 = vmatpush.bf16.xpose.msra.mxu0 0
        %878 = vmatpush.bf16.xpose.msra.mxu0 0
        %879 = vmatpush.bf16.xpose.msra.mxu0 0
        %880 = vmatpush.bf16.xpose.msra.mxu0 0
        %881 = vmatpush.bf16.xpose.msra.mxu0 0
        %882 = vmatpush.bf16.xpose.msra.mxu0 0
        %883 = vmatpush.bf16.xpose.msra.mxu0 %v874
        %884 = vmatmul.bf16.gmra.mxu0 %v871
        %v885 = vpop.f32.mrf.mxu0
        %v886 = vadd.f32 0.0, %v885
        %v887 = vpop.f32.mrf.mxu0
        %v888 = vadd.f32 0.0, %v887
        %889 = vdwg.mxu0
        %v890 = vmul.f32 %v886, 0.125
        %v891 = vmul.f32 %v888, 0.125
        %v892 = vsel %vm782, %v890, -1e+30
        %v893 = vsel %vm783, %v891, -1e+30
        %v894 = vsel %vm819, %v892, -inf
        %895 = vmax.xlane.f32.xlu0 %v894
        %v896 = vpop.xlane.xlu0 %895
        %v897 = vsel %vm819, %v893, -inf
        %898 = vmax.xlane.f32.xlu0 %v897
        %v899 = vpop.xlane.xlu0 %898
        %v900 = vsub.f32 %v892, %v896
        %v901 = vsub.f32 %v893, %v899
        %v902 = vmul.f32 %v900, 1.442695
        %v903 = vpow.pop %v902
        %v904 = vmul.f32 %v901, 1.442695
        %v905 = vpow.pop %v904
        %v906 = vsel %vm819, %v903, 0.0
        %907 = vadd.xlane.f32.xlu0 %v906
        %v908 = vpop.xlane.xlu0 %907
        %v909 = vsel %vm819, %v905, 0.0
        %910 = vadd.xlane.f32.xlu0 %v909
        %v911 = vpop.xlane.xlu0 %910
        %v912 = vrcp.pop %v908
        %v913 = vrcp.pop %v911
        %v914 = vmul.f32 %v903, %v912
        %v915 = vmul.f32 %v905, %v913
        %v916 = vpack.c.bf16 %v915, %v914
        %917 = vrot.lane.b32.xlu0 %v847, 64
        %v918 = vpop.permute.xlu0 %917
        %v921 = vsel %vm819, %v916, 0
        %923 = vmatpush.bf16.msra.mxu0 0
        %924 = vmatpush.bf16.msra.mxu0 0
        %925 = vmatpush.bf16.msra.mxu0 0
        %926 = vmatpush.bf16.msra.mxu0 0
        %927 = vmatpush.bf16.msra.mxu0 0
        %928 = vmatpush.bf16.msra.mxu0 0
        %929 = vmatpush.bf16.msra.mxu0 0
        %930 = vmatpush.bf16.msra.mxu0 %v918
        %931 = vmatmul.bf16.gmra.mxu0 %v921
        %v932 = vpop.f32.mrf.mxu0
        %v933 = vadd.f32 0.0, %v932
        %v934 = vpop.f32.mrf.mxu0
        %v935 = vadd.f32 0.0, %v934
        %936 = vdwg.mxu0
        %939 = vrot.lane.b32.xlu0 %v933, 64
        %v940 = vpop.permute.xlu0 %939
        %941 = vrot.lane.b32.xlu0 %v935, 64
        %v942 = vpop.permute.xlu0 %941
        %v945 = vsel %vm794, %v862, %v940
        %v946 = vsel %vm794, %v864, %v942
        %v947 = vpack.c.bf16 %v946, %v945
        %v948 = vld [vmem:[#allocation4] sm:$0xf]
        %v949 = vld [vmem:[#allocation4 + $0x4] sm:$0xf]
        %v950 = vld [vmem:[#allocation4 + $0x8] sm:$0xf]
        %v951 = vld [vmem:[#allocation4 + $0xc] sm:$0xf]
        %v952 = vld [vmem:[#allocation4 + $0x10] sm:$0xf]
        %v953 = vld [vmem:[#allocation4 + $0x14] sm:$0xf]
        %v954 = vld [vmem:[#allocation4 + $0x18] sm:$0xf]
        %v955 = vld [vmem:[#allocation4 + $0x1c] sm:$0xf]
        %v956 = vld [vmem:[#allocation4 + $0x20] sm:$0xf]
        %v957 = vld [vmem:[#allocation4 + $0x24] sm:$0xf]
        %v958 = vld [vmem:[#allocation4 + $0x28] sm:$0xf]
        %v959 = vld [vmem:[#allocation4 + $0x2c] sm:$0xf]
        %v960 = vld [vmem:[#allocation4 + $0x30] sm:$0xf]
        %v961 = vld [vmem:[#allocation4 + $0x34] sm:$0xf]
        %v962 = vld [vmem:[#allocation4 + $0x38] sm:$0xf]
        %v963 = vld [vmem:[#allocation4 + $0x3c] sm:$0xf]
        %v980 = vunpack.c.l.b16 %v948
        %v981 = vunpack.c.l.b16 %v949
        %v982 = vunpack.c.l.b16 %v950
        %v983 = vunpack.c.l.b16 %v951
        %v984 = vunpack.c.l.b16 %v952
        %v985 = vunpack.c.l.b16 %v953
        %v986 = vunpack.c.l.b16 %v954
        %v987 = vunpack.c.l.b16 %v955
        %v988 = vunpack.c.l.b16 %v956
        %v989 = vunpack.c.l.b16 %v957
        %v990 = vunpack.c.l.b16 %v958
        %v991 = vunpack.c.l.b16 %v959
        %v992 = vunpack.c.l.b16 %v960
        %v993 = vunpack.c.l.b16 %v961
        %v994 = vunpack.c.l.b16 %v962
        %v995 = vunpack.c.l.b16 %v963
        %v996 = vpack.c.b16 %v981, %v980
        %v997 = vpack.c.b16 %v983, %v982
        %v998 = vpack.c.b16 %v985, %v984
        %v999 = vpack.c.b16 %v987, %v986
        %v1000 = vpack.c.b16 %v989, %v988
        %v1001 = vpack.c.b16 %v991, %v990
        %v1002 = vpack.c.b16 %v993, %v992
        %v1003 = vpack.c.b16 %v995, %v994
        %1012 = vmatpush.bf16.msra.mxu0 %v1003
        %1013 = vmatpush.bf16.msra.mxu0 %v1002
        %1014 = vmatpush.bf16.msra.mxu0 %v1001
        %1015 = vmatpush.bf16.msra.mxu0 %v1000
        %1016 = vmatpush.bf16.msra.mxu0 %v999
        %1017 = vmatpush.bf16.msra.mxu0 %v998
        %1018 = vmatpush.bf16.msra.mxu0 %v997
        %1019 = vmatpush.bf16.msra.mxu0 %v996
        %1020 = vmatmul.bf16.gmra.mxu0 %v947
        %v1021 = vpop.f32.mrf.mxu0
        %v1022 = vadd.f32 0.0, %v1021
        %v1023 = vpop.f32.mrf.mxu0
        %v1024 = vadd.f32 0.0, %v1023
        %1025 = vdwg.mxu0
        %v1026 = vadd.f32 %v411, %v1022
        %v1027 = vadd.f32 %v412, %v1024
        %v1028 = vmul.f32 %v1026, %v1026
        %v1029 = vmul.f32 %v1027, %v1027
        %1030 = vadd.xlane.f32.xlu0 %v1028
        %v1031 = vpop.xlane.xlu0 %1030
        %1032 = vadd.xlane.f32.xlu0 %v1029
        %v1033 = vpop.xlane.xlu0 %1032
        %v1034 = vmul.f32 %v1031, %v425
        %v1035 = vmul.f32 %v1033, %v425
        %v1036 = vadd.f32 %v1034, 1e-05
        %v1037 = vadd.f32 %v1035, 1e-05
        %v1038 = vrsqrt.pop %v1036
        %v1039 = vmul.f32 %v1038, %v1036
        %v1040 = vmul.f32 %v1039, %v1038
        %v1041 = vmul.f32 0.5, %v1040
        %v1042 = vsub.f32 1.5, %v1041
        %v1043 = vmul.f32 %v1038, %v1042
        %vm1044 = vweird.f32 %v1036
        %vm1045 = vweird.f32 %v1038
        %vm1046 = vmor %vm1044, %vm1045
        %v1047 = vsel %vm1046, %v1038, %v1043
        %v1048 = vrsqrt.pop %v1037
        %v1049 = vmul.f32 %v1048, %v1037
        %v1050 = vmul.f32 %v1049, %v1048
        %v1051 = vmul.f32 0.5, %v1050
        %v1052 = vsub.f32 1.5, %v1051
        %v1053 = vmul.f32 %v1048, %v1052
        %vm1054 = vweird.f32 %v1037
        %vm1055 = vweird.f32 %v1048
        %vm1056 = vmor %vm1054, %vm1055
        %v1057 = vsel %vm1056, %v1048, %v1053
        %v1058 = vmul.f32 %v1026, %v1047
        %v1059 = vmul.f32 %v1027, %v1057
        %v1060 = vld [vmem:[%s7] sm:$0x1]
        %v1062 = vperm.slane %v1060, 0
        %v1064 = vmul.f32 %v1058, %v1062
        %v1065 = vmul.f32 %v1059, %v1062
        %v1066 = vpack.c.bf16 %v1065, %v1064
        %v1067 = vld [vmem:[%s8] sm:$0xff]
        %v1068 = vld [vmem:[%s8 + $0x8] sm:$0xff]
        %v1069 = vld [vmem:[%s8 + $0x10] sm:$0xff]
        %v1070 = vld [vmem:[%s8 + $0x18] sm:$0xff]
        %v1071 = vld [vmem:[%s8 + $0x20] sm:$0xff]
        %v1072 = vld [vmem:[%s8 + $0x28] sm:$0xff]
        %v1073 = vld [vmem:[%s8 + $0x30] sm:$0xff]
        %v1074 = vld [vmem:[%s8 + $0x38] sm:$0xff]
        %v1075 = vld [vmem:[%s8 + $0x40] sm:$0xff]
        %v1076 = vld [vmem:[%s8 + $0x48] sm:$0xff]
        %v1077 = vld [vmem:[%s8 + $0x50] sm:$0xff]
        %v1078 = vld [vmem:[%s8 + $0x58] sm:$0xff]
        %v1079 = vld [vmem:[%s8 + $0x60] sm:$0xff]
        %v1080 = vld [vmem:[%s8 + $0x68] sm:$0xff]
        %v1081 = vld [vmem:[%s8 + $0x70] sm:$0xff]
        %v1082 = vld [vmem:[%s8 + $0x78] sm:$0xff]
        %v1083 = vld [vmem:[%s8 + $0x80] sm:$0xff]
        %v1084 = vld [vmem:[%s8 + $0x88] sm:$0xff]
        %v1085 = vld [vmem:[%s8 + $0x90] sm:$0xff]
        %v1086 = vld [vmem:[%s8 + $0x98] sm:$0xff]
        %v1087 = vld [vmem:[%s8 + $0xa0] sm:$0xff]
        %v1088 = vld [vmem:[%s8 + $0xa8] sm:$0xff]
        %v1089 = vld [vmem:[%s8 + $0xb0] sm:$0xff]
        %v1090 = vld [vmem:[%s8 + $0xb8] sm:$0xff]
        %v1091 = vld [vmem:[%s8 + $0xc0] sm:$0xff]
        %v1092 = vld [vmem:[%s8 + $0xc8] sm:$0xff]
        %v1093 = vld [vmem:[%s8 + $0xd0] sm:$0xff]
        %v1094 = vld [vmem:[%s8 + $0xd8] sm:$0xff]
        %v1095 = vld [vmem:[%s8 + $0xe0] sm:$0xff]
        %v1096 = vld [vmem:[%s8 + $0xe8] sm:$0xff]
        %v1097 = vld [vmem:[%s8 + $0xf0] sm:$0xff]
        %v1098 = vld [vmem:[%s8 + $0xf8] sm:$0xff]
        %v1131 = vunpack.c.l.b16 %v1067
        %v1132 = vunpack.c.h.b16 %v1067
        %v1133 = vunpack.c.l.b16 %v1068
        %v1134 = vunpack.c.h.b16 %v1068
        %v1135 = vunpack.c.l.b16 %v1069
        %v1136 = vunpack.c.h.b16 %v1069
        %v1137 = vunpack.c.l.b16 %v1070
        %v1138 = vunpack.c.h.b16 %v1070
        %v1139 = vunpack.c.l.b16 %v1071
        %v1140 = vunpack.c.h.b16 %v1071
        %v1141 = vunpack.c.l.b16 %v1072
        %v1142 = vunpack.c.h.b16 %v1072
        %v1143 = vunpack.c.l.b16 %v1073
        %v1144 = vunpack.c.h.b16 %v1073
        %v1145 = vunpack.c.l.b16 %v1074
        %v1146 = vunpack.c.h.b16 %v1074
        %v1147 = vunpack.c.l.b16 %v1075
        %v1148 = vunpack.c.h.b16 %v1075
        %v1149 = vunpack.c.l.b16 %v1076
        %v1150 = vunpack.c.h.b16 %v1076
        %v1151 = vunpack.c.l.b16 %v1077
        %v1152 = vunpack.c.h.b16 %v1077
        %v1153 = vunpack.c.l.b16 %v1078
        %v1154 = vunpack.c.h.b16 %v1078
        %v1155 = vunpack.c.l.b16 %v1079
        %v1156 = vunpack.c.h.b16 %v1079
        %v1157 = vunpack.c.l.b16 %v1080
        %v1158 = vunpack.c.h.b16 %v1080
        %v1159 = vunpack.c.l.b16 %v1081
        %v1160 = vunpack.c.h.b16 %v1081
        %v1161 = vunpack.c.l.b16 %v1082
        %v1162 = vunpack.c.h.b16 %v1082
        %v1163 = vunpack.c.l.b16 %v1083
        %v1164 = vunpack.c.h.b16 %v1083
        %v1165 = vunpack.c.l.b16 %v1084
        %v1166 = vunpack.c.h.b16 %v1084
        %v1167 = vunpack.c.l.b16 %v1085
        %v1168 = vunpack.c.h.b16 %v1085
        %v1169 = vunpack.c.l.b16 %v1086
        %v1170 = vunpack.c.h.b16 %v1086
        %v1171 = vunpack.c.l.b16 %v1087
        %v1172 = vunpack.c.h.b16 %v1087
        %v1173 = vunpack.c.l.b16 %v1088
        %v1174 = vunpack.c.h.b16 %v1088
        %v1175 = vunpack.c.l.b16 %v1089
        %v1176 = vunpack.c.h.b16 %v1089
        %v1177 = vunpack.c.l.b16 %v1090
        %v1178 = vunpack.c.h.b16 %v1090
        %v1179 = vunpack.c.l.b16 %v1091
        %v1180 = vunpack.c.h.b16 %v1091
        %v1181 = vunpack.c.l.b16 %v1092
        %v1182 = vunpack.c.h.b16 %v1092
        %v1183 = vunpack.c.l.b16 %v1093
        %v1184 = vunpack.c.h.b16 %v1093
        %v1185 = vunpack.c.l.b16 %v1094
        %v1186 = vunpack.c.h.b16 %v1094
        %v1187 = vunpack.c.l.b16 %v1095
        %v1188 = vunpack.c.h.b16 %v1095
        %v1189 = vunpack.c.l.b16 %v1096
        %v1190 = vunpack.c.h.b16 %v1096
        %v1191 = vunpack.c.l.b16 %v1097
        %v1192 = vunpack.c.h.b16 %v1097
        %v1193 = vunpack.c.l.b16 %v1098
        %v1194 = vunpack.c.h.b16 %v1098
        %v1195 = vpack.c.b16 %v1135, %v1131
        %v1196 = vpack.c.b16 %v1136, %v1132
        %v1197 = vpack.c.b16 %v1137, %v1133
        %v1198 = vpack.c.b16 %v1138, %v1134
        %v1199 = vpack.c.b16 %v1143, %v1139
        %v1200 = vpack.c.b16 %v1144, %v1140
        %v1201 = vpack.c.b16 %v1145, %v1141
        %v1202 = vpack.c.b16 %v1146, %v1142
        %v1203 = vpack.c.b16 %v1151, %v1147
        %v1204 = vpack.c.b16 %v1152, %v1148
        %v1205 = vpack.c.b16 %v1153, %v1149
        %v1206 = vpack.c.b16 %v1154, %v1150
        %v1207 = vpack.c.b16 %v1159, %v1155
        %v1208 = vpack.c.b16 %v1160, %v1156
        %v1209 = vpack.c.b16 %v1161, %v1157
        %v1210 = vpack.c.b16 %v1162, %v1158
        %v1211 = vpack.c.b16 %v1167, %v1163
        %v1212 = vpack.c.b16 %v1168, %v1164
        %v1213 = vpack.c.b16 %v1169, %v1165
        %v1214 = vpack.c.b16 %v1170, %v1166
        %v1215 = vpack.c.b16 %v1175, %v1171
        %v1216 = vpack.c.b16 %v1176, %v1172
        %v1217 = vpack.c.b16 %v1177, %v1173
        %v1218 = vpack.c.b16 %v1178, %v1174
        %v1219 = vpack.c.b16 %v1183, %v1179
        %v1220 = vpack.c.b16 %v1184, %v1180
        %v1221 = vpack.c.b16 %v1185, %v1181
        %v1222 = vpack.c.b16 %v1186, %v1182
        %v1223 = vpack.c.b16 %v1191, %v1187
        %v1224 = vpack.c.b16 %v1192, %v1188
        %v1225 = vpack.c.b16 %v1193, %v1189
        %v1226 = vpack.c.b16 %v1194, %v1190
        %1259 = vmatpush.bf16.msra.mxu0 %v1223
        %1260 = vmatpush.bf16.msra.mxu0 %v1219
        %1261 = vmatpush.bf16.msra.mxu0 %v1215
        %1262 = vmatpush.bf16.msra.mxu0 %v1211
        %1263 = vmatpush.bf16.msra.mxu0 %v1207
        %1264 = vmatpush.bf16.msra.mxu0 %v1203
        %1265 = vmatpush.bf16.msra.mxu0 %v1199
        %1266 = vmatpush.bf16.msra.mxu0 %v1195
        %1267 = vmatmul.bf16.gmra.mxu0 %v1066
        %v1268 = vpop.f32.mrf.mxu0
        %v1269 = vadd.f32 0.0, %v1268
        %v1270 = vpop.f32.mrf.mxu0
        %v1271 = vadd.f32 0.0, %v1270
        %1272 = vdwg.mxu0
        %1273 = vmatpush.bf16.msra.mxu0 %v1224
        %1274 = vmatpush.bf16.msra.mxu0 %v1220
        %1275 = vmatpush.bf16.msra.mxu0 %v1216
        %1276 = vmatpush.bf16.msra.mxu0 %v1212
        %1277 = vmatpush.bf16.msra.mxu0 %v1208
        %1278 = vmatpush.bf16.msra.mxu0 %v1204
        %1279 = vmatpush.bf16.msra.mxu0 %v1200
        %1280 = vmatpush.bf16.msra.mxu0 %v1196
        %1281 = vmatmul.bf16.gmra.mxu0 %v1066
        %v1282 = vpop.f32.mrf.mxu0
        %v1283 = vadd.f32 0.0, %v1282
        %v1284 = vpop.f32.mrf.mxu0
        %v1285 = vadd.f32 0.0, %v1284
        %1286 = vdwg.mxu0
        %1287 = vmatpush.bf16.msra.mxu0 %v1225
        %1288 = vmatpush.bf16.msra.mxu0 %v1221
        %1289 = vmatpush.bf16.msra.mxu0 %v1217
        %1290 = vmatpush.bf16.msra.mxu0 %v1213
        %1291 = vmatpush.bf16.msra.mxu0 %v1209
        %1292 = vmatpush.bf16.msra.mxu0 %v1205
        %1293 = vmatpush.bf16.msra.mxu0 %v1201
        %1294 = vmatpush.bf16.msra.mxu0 %v1197
        %1295 = vmatmul.bf16.gmra.mxu0 %v1066
        %v1296 = vpop.f32.mrf.mxu0
        %v1297 = vadd.f32 0.0, %v1296
        %v1298 = vpop.f32.mrf.mxu0
        %v1299 = vadd.f32 0.0, %v1298
        %1300 = vdwg.mxu0
        %1301 = vmatpush.bf16.msra.mxu0 %v1226
        %1302 = vmatpush.bf16.msra.mxu0 %v1222
        %1303 = vmatpush.bf16.msra.mxu0 %v1218
        %1304 = vmatpush.bf16.msra.mxu0 %v1214
        %1305 = vmatpush.bf16.msra.mxu0 %v1210
        %1306 = vmatpush.bf16.msra.mxu0 %v1206
        %1307 = vmatpush.bf16.msra.mxu0 %v1202
        %1308 = vmatpush.bf16.msra.mxu0 %v1198
        %1309 = vmatmul.bf16.gmra.mxu0 %v1066
        %v1310 = vpop.f32.mrf.mxu0
        %v1311 = vadd.f32 0.0, %v1310
        %v1312 = vpop.f32.mrf.mxu0
        %v1313 = vadd.f32 0.0, %v1312
        %1314 = vdwg.mxu0
        %v1315 = vxor.u32 %v1269, 2147483648
        %v1316 = vxor.u32 %v1283, 2147483648
        %v1317 = vxor.u32 %v1271, 2147483648
        %v1318 = vxor.u32 %v1285, 2147483648
        %v1319 = vmul.f32 %v1315, 1.442695
        %v1320 = vpow.pop %v1319
        %v1321 = vmul.f32 %v1316, 1.442695
        %v1322 = vpow.pop %v1321
        %v1323 = vmul.f32 %v1317, 1.442695
        %v1324 = vpow.pop %v1323
        %v1325 = vmul.f32 %v1318, 1.442695
        %v1326 = vpow.pop %v1325
        %v1327 = vadd.f32 %v1320, 1.0
        %v1328 = vadd.f32 %v1322, 1.0
        %v1329 = vadd.f32 %v1324, 1.0
        %v1330 = vadd.f32 %v1326, 1.0
        %v1331 = vrcp.pop %v1327
        %v1332 = vmul.f32 %v1327, %v1331
        %v1333 = vsub.f32 1.0, %v1332
        %v1334 = vmul.f32 %v1331, %v1333
        %v1335 = vadd.f32 %v1331, %v1334
        %vm1336 = vweird.f32 %v1327
        %vm1337 = vweird.f32 %v1331
        %vm1338 = vmor %vm1336, %vm1337
        %v1339 = vsel %vm1338, %v1331, %v1335
        %v1340 = vand.u32 2147483647, %v1327
        %vm1341 = vcmp.eq.f32.partialorder %v1340, 8.507059e+37
        %v1342 = vand.u32 %v1327, 2147483648
        %v1343 = vor.u32 1.1754944e-38, %v1342
        %v1344 = vsel %vm1341, %v1343, %v1339
        %v1345 = vmul.f32 1.0, %v1344
        %v1346 = vrcp.pop %v1328
        %v1347 = vmul.f32 %v1328, %v1346
        %v1348 = vsub.f32 1.0, %v1347
        %v1349 = vmul.f32 %v1346, %v1348
        %v1350 = vadd.f32 %v1346, %v1349
        %vm1351 = vweird.f32 %v1328
        %vm1352 = vweird.f32 %v1346
        %vm1353 = vmor %vm1351, %vm1352
        %v1354 = vsel %vm1353, %v1346, %v1350
        %v1355 = vand.u32 2147483647, %v1328
        %vm1356 = vcmp.eq.f32.partialorder %v1355, 8.507059e+37
        %v1357 = vand.u32 %v1328, 2147483648
        %v1358 = vor.u32 1.1754944e-38, %v1357
        %v1359 = vsel %vm1356, %v1358, %v1354
        %v1360 = vmul.f32 1.0, %v1359
        %v1361 = vrcp.pop %v1329
        %v1362 = vmul.f32 %v1329, %v1361
        %v1363 = vsub.f32 1.0, %v1362
        %v1364 = vmul.f32 %v1361, %v1363
        %v1365 = vadd.f32 %v1361, %v1364
        %vm1366 = vweird.f32 %v1329
        %vm1367 = vweird.f32 %v1361
        %vm1368 = vmor %vm1366, %vm1367
        %v1369 = vsel %vm1368, %v1361, %v1365
        %v1370 = vand.u32 2147483647, %v1329
        %vm1371 = vcmp.eq.f32.partialorder %v1370, 8.507059e+37
        %v1372 = vand.u32 %v1329, 2147483648
        %v1373 = vor.u32 1.1754944e-38, %v1372
        %v1374 = vsel %vm1371, %v1373, %v1369
        %v1375 = vmul.f32 1.0, %v1374
        %v1376 = vrcp.pop %v1330
        %v1377 = vmul.f32 %v1330, %v1376
        %v1378 = vsub.f32 1.0, %v1377
        %v1379 = vmul.f32 %v1376, %v1378
        %v1380 = vadd.f32 %v1376, %v1379
        %vm1381 = vweird.f32 %v1330
        %vm1382 = vweird.f32 %v1376
        %vm1383 = vmor %vm1381, %vm1382
        %v1384 = vsel %vm1383, %v1376, %v1380
        %v1385 = vand.u32 2147483647, %v1330
        %vm1386 = vcmp.eq.f32.partialorder %v1385, 8.507059e+37
        %v1387 = vand.u32 %v1330, 2147483648
        %v1388 = vor.u32 1.1754944e-38, %v1387
        %v1389 = vsel %vm1386, %v1388, %v1384
        %v1390 = vmul.f32 1.0, %v1389
        %v1391 = vmul.f32 %v1269, %v1345
        %v1392 = vmul.f32 %v1283, %v1360
        %v1393 = vmul.f32 %v1271, %v1375
        %v1394 = vmul.f32 %v1285, %v1390
        %v1395 = vmul.f32 %v1391, %v1297
        %v1396 = vmul.f32 %v1392, %v1311
        %v1397 = vmul.f32 %v1393, %v1299
        %v1398 = vmul.f32 %v1394, %v1313
        %v1399 = vpack.c.bf16 %v1397, %v1395
        %v1400 = vpack.c.bf16 %v1398, %v1396
        %v1401 = vld [vmem:[#allocation6] sm:$0xf]
        %v1402 = vld [vmem:[#allocation6 + $0x4] sm:$0xf]
        %v1403 = vld [vmem:[#allocation6 + $0x8] sm:$0xf]
        %v1404 = vld [vmem:[#allocation6 + $0xc] sm:$0xf]
        %v1405 = vld [vmem:[#allocation6 + $0x10] sm:$0xf]
        %v1406 = vld [vmem:[#allocation6 + $0x14] sm:$0xf]
        %v1407 = vld [vmem:[#allocation6 + $0x18] sm:$0xf]
        %v1408 = vld [vmem:[#allocation6 + $0x1c] sm:$0xf]
        %v1409 = vld [vmem:[#allocation6 + $0x20] sm:$0xf]
        %v1410 = vld [vmem:[#allocation6 + $0x24] sm:$0xf]
        %v1411 = vld [vmem:[#allocation6 + $0x28] sm:$0xf]
        %v1412 = vld [vmem:[#allocation6 + $0x2c] sm:$0xf]
        %v1413 = vld [vmem:[#allocation6 + $0x30] sm:$0xf]
        %v1414 = vld [vmem:[#allocation6 + $0x34] sm:$0xf]
        %v1415 = vld [vmem:[#allocation6 + $0x38] sm:$0xf]
        %v1416 = vld [vmem:[#allocation6 + $0x3c] sm:$0xf]
        %v1417 = vld [vmem:[#allocation6 + $0x40] sm:$0xf]
        %v1418 = vld [vmem:[#allocation6 + $0x44] sm:$0xf]
        %v1419 = vld [vmem:[#allocation6 + $0x48] sm:$0xf]
        %v1420 = vld [vmem:[#allocation6 + $0x4c] sm:$0xf]
        %v1421 = vld [vmem:[#allocation6 + $0x50] sm:$0xf]
        %v1422 = vld [vmem:[#allocation6 + $0x54] sm:$0xf]
        %v1423 = vld [vmem:[#allocation6 + $0x58] sm:$0xf]
        %v1424 = vld [vmem:[#allocation6 + $0x5c] sm:$0xf]
        %v1425 = vld [vmem:[#allocation6 + $0x60] sm:$0xf]
        %v1426 = vld [vmem:[#allocation6 + $0x64] sm:$0xf]
        %v1427 = vld [vmem:[#allocation6 + $0x68] sm:$0xf]
        %v1428 = vld [vmem:[#allocation6 + $0x6c] sm:$0xf]
        %v1429 = vld [vmem:[#allocation6 + $0x70] sm:$0xf]
        %v1430 = vld [vmem:[#allocation6 + $0x74] sm:$0xf]
        %v1431 = vld [vmem:[#allocation6 + $0x78] sm:$0xf]
        %v1432 = vld [vmem:[#allocation6 + $0x7c] sm:$0xf]
        %v1465 = vunpack.c.l.b16 %v1401
        %v1466 = vunpack.c.l.b16 %v1402
        %v1467 = vunpack.c.l.b16 %v1403
        %v1468 = vunpack.c.l.b16 %v1404
        %v1469 = vunpack.c.l.b16 %v1405
        %v1470 = vunpack.c.l.b16 %v1406
        %v1471 = vunpack.c.l.b16 %v1407
        %v1472 = vunpack.c.l.b16 %v1408
        %v1473 = vunpack.c.l.b16 %v1409
        %v1474 = vunpack.c.l.b16 %v1410
        %v1475 = vunpack.c.l.b16 %v1411
        %v1476 = vunpack.c.l.b16 %v1412
        %v1477 = vunpack.c.l.b16 %v1413
        %v1478 = vunpack.c.l.b16 %v1414
        %v1479 = vunpack.c.l.b16 %v1415
        %v1480 = vunpack.c.l.b16 %v1416
        %v1481 = vunpack.c.l.b16 %v1417
        %v1482 = vunpack.c.l.b16 %v1418
        %v1483 = vunpack.c.l.b16 %v1419
        %v1484 = vunpack.c.l.b16 %v1420
        %v1485 = vunpack.c.l.b16 %v1421
        %v1486 = vunpack.c.l.b16 %v1422
        %v1487 = vunpack.c.l.b16 %v1423
        %v1488 = vunpack.c.l.b16 %v1424
        %v1489 = vunpack.c.l.b16 %v1425
        %v1490 = vunpack.c.l.b16 %v1426
        %v1491 = vunpack.c.l.b16 %v1427
        %v1492 = vunpack.c.l.b16 %v1428
        %v1493 = vunpack.c.l.b16 %v1429
        %v1494 = vunpack.c.l.b16 %v1430
        %v1495 = vunpack.c.l.b16 %v1431
        %v1496 = vunpack.c.l.b16 %v1432
        %v1497 = vpack.c.b16 %v1466, %v1465
        %v1498 = vpack.c.b16 %v1468, %v1467
        %v1499 = vpack.c.b16 %v1470, %v1469
        %v1500 = vpack.c.b16 %v1472, %v1471
        %v1501 = vpack.c.b16 %v1474, %v1473
        %v1502 = vpack.c.b16 %v1476, %v1475
        %v1503 = vpack.c.b16 %v1478, %v1477
        %v1504 = vpack.c.b16 %v1480, %v1479
        %v1505 = vpack.c.b16 %v1482, %v1481
        %v1506 = vpack.c.b16 %v1484, %v1483
        %v1507 = vpack.c.b16 %v1486, %v1485
        %v1508 = vpack.c.b16 %v1488, %v1487
        %v1509 = vpack.c.b16 %v1490, %v1489
        %v1510 = vpack.c.b16 %v1492, %v1491
        %v1511 = vpack.c.b16 %v1494, %v1493
        %v1512 = vpack.c.b16 %v1496, %v1495
        %1529 = vmatpush.bf16.msra.mxu0 %v1504
        %1530 = vmatpush.bf16.msra.mxu0 %v1503
        %1531 = vmatpush.bf16.msra.mxu0 %v1502
        %1532 = vmatpush.bf16.msra.mxu0 %v1501
        %1533 = vmatpush.bf16.msra.mxu0 %v1500
        %1534 = vmatpush.bf16.msra.mxu0 %v1499
        %1535 = vmatpush.bf16.msra.mxu0 %v1498
        %1536 = vmatpush.bf16.msra.mxu0 %v1497
        %1537 = vmatmul.bf16.gmra.mxu0 %v1399
        %v1538 = vpop.f32.mrf.mxu0
        %v1539 = vadd.f32 0.0, %v1538
        %v1540 = vpop.f32.mrf.mxu0
        %v1541 = vadd.f32 0.0, %v1540
        %1542 = vdwg.mxu0
        %1543 = vmatpush.bf16.msra.mxu0 %v1512
        %1544 = vmatpush.bf16.msra.mxu0 %v1511
        %1545 = vmatpush.bf16.msra.mxu0 %v1510
        %1546 = vmatpush.bf16.msra.mxu0 %v1509
        %1547 = vmatpush.bf16.msra.mxu0 %v1508
        %1548 = vmatpush.bf16.msra.mxu0 %v1507
        %1549 = vmatpush.bf16.msra.mxu0 %v1506
        %1550 = vmatpush.bf16.msra.mxu0 %v1505
        %1551 = vmatmul.bf16.gmra.mxu0 %v1400
        %v1552 = vpop.f32.mrf.mxu0
        %v1553 = vadd.f32 %v1539, %v1552
        %v1554 = vpop.f32.mrf.mxu0
        %v1555 = vadd.f32 %v1541, %v1554
        %1556 = vdwg.mxu0
        %v1557 = vadd.f32 %v1026, %v1553
        %v1558 = vadd.f32 %v1027, %v1555
        %1559 = vst [vmem:[%s409] sm:$0xff] %v1557
        %1560 = vst [vmem:[%s409 + $0x8] sm:$0xff] %v1558
        %p1561 = scmp.lt.s32.totalorder %s23, 1
        %s1562 = scalar_select %p1561, %s23, 1
        %s1563 = smul.addr %s1562, 2
        %s1564 = smul.addr %s1563, 8
        %s1565 = scalar_lea.vmem %s10, %s1564
        // Predicated region
        $region73: #{base_transformer_forward.3} parent=59 // pred_check
          %p1566 = pneg %p256
        $region74: #{base_transformer_forward.3} parent=59 // pred_check_branch
          %1568 = sbr.rel (%p1566) target = $region76
        $region75: #{base_transformer_forward.3} parent=59 // pred_region
          _
        $region76: #{base_transformer_forward.3} parent=59 // pred_fallthru
          _
      $region60: #{base_transformer_forward.3} parent=5 // pred_fallthru
        _
      %p1569 = scmp.le.s32.totalorder 2, %s18
      // Predicated region
      $region77: #{base_transformer_forward.3} parent=5 // pred_check
        %p1570 = pneg %p1569
      $region78: #{base_transformer_forward.3} parent=5 // pred_check_branch
        %1572 = sbr.rel (%p1570) target = $region80
      $region79: #{base_transformer_forward.3} parent=5 // pred_region
        %s1573 = ssub.s32 %s18, 2
        // Predicated region
        $region81: #{base_transformer_forward.3} parent=79 // pred_check
          %p1574 = pneg %p262
        $region82: #{base_transformer_forward.3} parent=79 // pred_check_branch
          %1576 = sbr.rel (%p1574) target = $region84
        $region83: #{base_transformer_forward.3} parent=79 // pred_region
          %p1577 = scmp.lt.s32.totalorder %s24, 1
          %s1578 = scalar_select %p1577, %s24, 1
          %s1579 = smul.addr %s1578, 2
          %s1580 = smul.addr %s1579, 8
          %s1581 = scalar_lea.vmem %s10, %s1580
        $region84: #{base_transformer_forward.3} parent=79 // pred_fallthru
          _
      $region80: #{base_transformer_forward.3} parent=5 // pred_fallthru
        _
    $region6: #{base_transformer_forward.3} parent=1 // loop_footer
      %s22 = sadd.s32 1, %s18
    $region7: #{base_transformer_forward.3} parent=1 // loop_footer_branch
      %17 = sbr.rel target = $region3
    $region8: #{base_transformer_forward.3} parent=1 // loop_exit
      _
    %1582 = vsyncpa [#allocation3], 1
    %s1583 = scalar_lea.sflag [#allocation3], 1
    %1584 = vsyncpa %s1583, 1
    %1585 = vsyncpa [#allocation5], 1

</llo_original>
